<compile_context>
chip_gen: v6e
topology: v6e:2x2x1
jax: 0.10.0
libtpu: 0.0.40
codegen_flags: <defaults>
</compile_context>

<pallas_src>
import jax
import jax.numpy as jnp
from jax.experimental import pallas as pl
from jax.experimental.pallas import tpu as pltpu

F32 = jnp.float32
BF16 = jnp.bfloat16


def _round_up(x, m):
    return ((x + m - 1) // m) * m


def _relu(x):
    return jnp.maximum(x, 0.0)


def mlp_kernel(
    x_ref,                     # (TB, F_in) bf16
    w0_ref,                    # (F_in, H)  bf16
    w11_ref, w12_ref, ww1_ref,  # stage 1 weights (H, H) bf16
    w21_ref, w22_ref, ww2_ref,  # stage 2 weights (H, H) bf16
    wf1_ref,                   # (H, 128)   bf16
    wf2_ref,                   # (128, out_pad) bf16
    bias_ref,                  # (7, maxw)  f32  rows: b0,b11,b1f,b21,b2f,bf1,bf2
    o_ref,                     # (TB, out_pad) f32
):
    H = w0_ref.shape[1]
    n_f1 = wf1_ref.shape[1]
    n_out = wf2_ref.shape[1]

    def dot(a_bf16, w_ref):
        return jnp.dot(a_bf16, w_ref[...], preferred_element_type=F32)

    b0 = bias_ref[0:1, 0:H]
    b11 = bias_ref[1:2, 0:H]
    b1f = bias_ref[2:3, 0:H]
    b21 = bias_ref[3:4, 0:H]
    b2f = bias_ref[4:5, 0:H]
    bf1 = bias_ref[5:6, 0:n_f1]
    bf2 = bias_ref[6:7, 0:n_out]

    # h = relu(fc0(x))
    h = _relu(dot(x_ref[...], w0_ref) + b0)                          # f32 (TB, H)

    # Residual stage 1: relu(mlp1(h) + w1(h)); two K=H dots accumulated in f32.
    h_bf = h.astype(BF16)
    t = _relu(dot(h_bf, w11_ref) + b11)
    h = _relu(dot(t.astype(BF16), w12_ref) + dot(h_bf, ww1_ref) + b1f)

    # Residual stage 2: relu(mlp2(h) + w2(h)).
    h_bf = h.astype(BF16)
    t = _relu(dot(h_bf, w21_ref) + b21)
    h = _relu(dot(t.astype(BF16), w22_ref) + dot(h_bf, ww2_ref) + b2f)

    # Head: relu(fc1(h)) ; fc2
    h = _relu(dot(h.astype(BF16), wf1_ref) + bf1)
    o_ref[...] = (dot(h.astype(BF16), wf2_ref) + bf2).astype(o_ref.dtype)


def prepare_params(params):
    """Cast weights to bf16, pre-sum the residual biases, pad fc2 lanes,
    and pack all bias rows into a single (7, maxw) f32 array (one DMA)."""
    (w0, b0, w11, b11, w12, b12, ww1, bw1,
     w21, b21, w22, b22, ww2, bw2, wf1, bf1, wf2, bf2) = params

    H = w0.shape[1]
    n_f1 = wf1.shape[1]
    out_f = wf2.shape[1]
    out_pad = _round_up(out_f, 128)

    wf2_p = jnp.pad(wf2, ((0, 0), (0, out_pad - out_f))).astype(BF16)
    bf2_p = jnp.pad(bf2, ((0, 0), (0, out_pad - out_f)))

    weights = tuple(
        w.astype(BF16) for w in (w0, w11, w12, ww1, w21, w22, ww2, wf1)
    ) + (wf2_p,)

    maxw = max(H, n_f1, out_pad)

    def row(b):
        b = b.reshape(1, -1)
        return jnp.pad(b, ((0, 0), (0, maxw - b.shape[1])))

    bias_pack = jnp.concatenate(
        [row(b0), row(b11), row(b12 + bw1), row(b21), row(b22 + bw2),
         row(bf1), row(bf2_p)],
        axis=0,
    ).astype(F32)

    return weights, bias_pack, out_f, out_pad


def _choose_block_b(B):
    """Adaptive batch tile: tiny pad for latency-style calls, >= 2 tiles for
    megacore when the batch is big enough, larger tiles to amortize grid-step
    overhead on big batches."""
    if B <= 32:
        return _round_up(B, 16)          # small-batch fast path (one tiny tile)
    if B <= 256:
        return _round_up(pl.cdiv(B, 2), 16)    # 2 tiles, modest padding
    return min(512, _round_up(pl.cdiv(B, 2), 128))  # big tiles, still >= 2


def mlp_forward(x, params, *, block_b=None):
    """x: (B, input_features) or (input_features,).  params: flat (w, b) tuple."""
    squeeze = x.ndim == 1
    if squeeze:
        x = x[None, :]

    weights, bias_pack, out_f, out_pad = prepare_params(params)

    B, f_in = x.shape
    bb = _choose_block_b(B) if block_b is None else block_b
    nb = pl.cdiv(B, bb)
    b_pad = nb * bb
    if b_pad != B:
        x = jnp.pad(x, ((0, b_pad - B), (0, 0)))
    x_bf16 = x.astype(BF16)

    # Activation tiles stream over the batch grid axis; weights / bias pack are
    # VMEM-resident (constant index_map -> fetched once).
    in_specs = [pl.BlockSpec((bb, f_in), lambda i: (i, 0))]
    for w in weights:
        in_specs.append(pl.BlockSpec(w.shape, lambda i: (0, 0)))
    in_specs.append(pl.BlockSpec(bias_pack.shape, lambda i: (0, 0)))
    out_spec = pl.BlockSpec((bb, out_pad), lambda i: (i, 0))

    flops = 2 * b_pad * sum(w.shape[0] * w.shape[1] for w in weights)
    bytes_accessed = (
        int(x_bf16.size) * 2
        + sum(int(w.size) * 2 for w in weights)
        + int(bias_pack.size) * 4
        + b_pad * out_pad * 4
    )

    out = pl.pallas_call(
        mlp_kernel,
        out_shape=jax.ShapeDtypeStruct((b_pad, out_pad), jnp.float32),
        grid=(nb,),
        in_specs=in_specs,
        out_specs=out_spec,
        compiler_params=pltpu.CompilerParams(
            dimension_semantics=("parallel",)),
        cost_estimate=pl.CostEstimate(
            flops=flops, transcendentals=0, bytes_accessed=bytes_accessed),
    )(x_bf16, *weights, bias_pack)

    out = out[:B, :out_f]
    if squeeze:
        out = out[0]
    return out


def init_params(key, input_features, output_features, hidden_size=256):
    """Deterministic PyTorch-Linear-style init; weights stored as (in, out)."""
    sizes = [
        (input_features, hidden_size),   # fc0
        (hidden_size, hidden_size),      # mlp1[0]
        (hidden_size, hidden_size),      # mlp1[2]
        (hidden_size, hidden_size),      # w1
        (hidden_size, hidden_size),      # mlp2[0]
        (hidden_size, hidden_size),      # mlp2[2]
        (hidden_size, hidden_size),      # w2
        (hidden_size, 128),              # fc1
        (128, output_features),          # fc2
    ]
    params = []
    for (fan_in, fan_out) in sizes:
        key, kw, kb = jax.random.split(key, 3)
        bound = 1.0 / (fan_in ** 0.5)
        w = jax.random.uniform(kw, (fan_in, fan_out), jnp.float32, -bound, bound)
        b = jax.random.uniform(kb, (1, fan_out), jnp.float32, -bound, bound)
        params += [w, b]
    return tuple(params)


def reference_forward(x, params):
    """Pure-JAX reference mirroring the kernel's bf16-matmul / f32-accumulate math."""
    def lin(h, w, b):
        return jnp.dot(h.astype(BF16), w.astype(BF16),
                       preferred_element_type=F32) + b

    (w0, b0, w11, b11, w12, b12, ww1, bw1,
     w21, b21, w22, b22, ww2, bw2, wf1, bf1, wf2, bf2) = params
    h = jax.nn.relu(lin(x, w0, b0))
    h = jax.nn.relu(lin(jax.nn.relu(lin(h, w11, b11)), w12, b12)
                    + lin(h, ww1, bw1))
    h = jax.nn.relu(lin(jax.nn.relu(lin(h, w21, b21)), w22, b22)
                    + lin(h, ww2, bw2))
    h = jax.nn.relu(lin(h, wf1, bf1))
    return lin(h, wf2, bf2)


if __name__ == "__main__":
    # 3-body system: history_frames=2 -> input_features=24, output_features=12
    input_features = 24
    output_features = 12
    hidden_size = 256

    key = jax.random.PRNGKey(0)
    key, kx1, kx2 = jax.random.split(key, 3)
    params = init_params(key, input_features, output_features, hidden_size)

    # Small-batch latency path (B=8 -> one 16-row tile).
    x_small = jax.random.normal(kx1, (8, input_features), jnp.float32)
    out_small = jax.block_until_ready(mlp_forward(x_small, params))
    ref_small = reference_forward(x_small, params)
    assert out_small.shape == (8, output_features)
    assert jnp.allclose(out_small, ref_small, atol=1e-2, rtol=1e-2), (
        float(jnp.max(jnp.abs(out_small - ref_small))))

    # Multi-tile path (B=40 -> two 32-row tiles exercising the parallel grid).
    x_big = jax.random.normal(kx2, (40, input_features), jnp.float32)
    out_big = jax.block_until_ready(mlp_forward(x_big, params))
    ref_big = reference_forward(x_big, params)
    assert out_big.shape == (40, output_features)
    assert jnp.allclose(out_big, ref_big, atol=1e-2, rtol=1e-2), (
        float(jnp.max(jnp.abs(out_big - ref_big))))

    print("KERNEL_OK")
</pallas_src>

<mosaic_0001>
module attributes {stable_mosaic.version = 11 : i64} {
  func.func @mlp_kernel(%arg0: i32, %arg1: memref<16x24xbf16, #tpu.memory_space<vmem>>, %arg2: memref<24x256xbf16, #tpu.memory_space<vmem>>, %arg3: memref<256x256xbf16, #tpu.memory_space<vmem>>, %arg4: memref<256x256xbf16, #tpu.memory_space<vmem>>, %arg5: memref<256x256xbf16, #tpu.memory_space<vmem>>, %arg6: memref<256x256xbf16, #tpu.memory_space<vmem>>, %arg7: memref<256x256xbf16, #tpu.memory_space<vmem>>, %arg8: memref<256x256xbf16, #tpu.memory_space<vmem>>, %arg9: memref<256x128xbf16, #tpu.memory_space<vmem>>, %arg10: memref<128x128xbf16, #tpu.memory_space<vmem>>, %arg11: memref<7x256xf32, #tpu.memory_space<vmem>>, %arg12: memref<16x128xf32, #tpu.memory_space<vmem>>) attributes {dimension_semantics = [#tpu.dimension_semantics<parallel>], iteration_bounds = array<i64: 1>, scalar_prefetch = 0 : i64, scratch_operands = 0 : i64, tpu.core_type = #tpu.core_type<tc>, window_params = [{transform_indices = @transform_0, window_bounds = array<i64: 16, 24>}, {pipeline_mode = #tpu.pipeline_mode<synchronous>, transform_indices = @transform_1, window_bounds = array<i64: 24, 256>}, {pipeline_mode = #tpu.pipeline_mode<synchronous>, transform_indices = @transform_2, window_bounds = array<i64: 256, 256>}, {pipeline_mode = #tpu.pipeline_mode<synchronous>, transform_indices = @transform_3, window_bounds = array<i64: 256, 256>}, {pipeline_mode = #tpu.pipeline_mode<synchronous>, transform_indices = @transform_4, window_bounds = array<i64: 256, 256>}, {pipeline_mode = #tpu.pipeline_mode<synchronous>, transform_indices = @transform_5, window_bounds = array<i64: 256, 256>}, {pipeline_mode = #tpu.pipeline_mode<synchronous>, transform_indices = @transform_6, window_bounds = array<i64: 256, 256>}, {pipeline_mode = #tpu.pipeline_mode<synchronous>, transform_indices = @transform_7, window_bounds = array<i64: 256, 256>}, {pipeline_mode = #tpu.pipeline_mode<synchronous>, transform_indices = @transform_8, window_bounds = array<i64: 256, 128>}, {pipeline_mode = #tpu.pipeline_mode<synchronous>, transform_indices = @transform_9, window_bounds = array<i64: 128, 128>}, {pipeline_mode = #tpu.pipeline_mode<synchronous>, transform_indices = @transform_10, window_bounds = array<i64: 7, 256>}, {transform_indices = @transform_11, window_bounds = array<i64: 16, 128>}]} {
    %c0 = arith.constant 0 : index
    %c0_0 = arith.constant 0 : index
    %0 = vector.load %arg11[%c0, %c0_0] : memref<7x256xf32, #tpu.memory_space<vmem>>, vector<1x256xf32>
    %c1 = arith.constant 1 : index
    %c0_1 = arith.constant 0 : index
    %1 = vector.load %arg11[%c1, %c0_1] : memref<7x256xf32, #tpu.memory_space<vmem>>, vector<1x256xf32>
    %c2 = arith.constant 2 : index
    %c0_2 = arith.constant 0 : index
    %2 = vector.load %arg11[%c2, %c0_2] : memref<7x256xf32, #tpu.memory_space<vmem>>, vector<1x256xf32>
    %c3 = arith.constant 3 : index
    %c0_3 = arith.constant 0 : index
    %3 = vector.load %arg11[%c3, %c0_3] : memref<7x256xf32, #tpu.memory_space<vmem>>, vector<1x256xf32>
    %c4 = arith.constant 4 : index
    %c0_4 = arith.constant 0 : index
    %4 = vector.load %arg11[%c4, %c0_4] : memref<7x256xf32, #tpu.memory_space<vmem>>, vector<1x256xf32>
    %c5 = arith.constant 5 : index
    %c0_5 = arith.constant 0 : index
    %5 = vector.load %arg11[%c5, %c0_5] : memref<7x256xf32, #tpu.memory_space<vmem>>, vector<1x128xf32>
    %c6 = arith.constant 6 : index
    %c0_6 = arith.constant 0 : index
    %6 = vector.load %arg11[%c6, %c0_6] : memref<7x256xf32, #tpu.memory_space<vmem>>, vector<1x128xf32>
    %c0_7 = arith.constant 0 : index
    %c0_8 = arith.constant 0 : index
    %7 = vector.load %arg1[%c0_7, %c0_8] : memref<16x24xbf16, #tpu.memory_space<vmem>>, vector<16x24xbf16>
    %c0_9 = arith.constant 0 : index
    %c0_10 = arith.constant 0 : index
    %8 = vector.load %arg2[%c0_9, %c0_10] : memref<24x256xbf16, #tpu.memory_space<vmem>>, vector<24x256xbf16>
    %cst = arith.constant dense<0.000000e+00> : vector<16x256xf32>
    %9 = tpu.matmul %7, %8, %cst {dimension_numbers = #tpu.dot_dimension_numbers<[1], [0], [0], [1], [0, 0, 1, 1], [], []>} : vector<16x24xbf16>, vector<24x256xbf16>, vector<16x256xf32> -> vector<16x256xf32>
    %10 = vector.broadcast %0 : vector<1x256xf32> to vector<16x256xf32>
    %11 = arith.addf %9, %10 : vector<16x256xf32>
    %cst_11 = arith.constant 0.000000e+00 : f32
    %12 = vector.broadcast %cst_11 : f32 to vector<16x256xf32>
    %13 = arith.maximumf %11, %12 : vector<16x256xf32>
    %14 = arith.truncf %13 : vector<16x256xf32> to vector<16x256xbf16>
    %c0_12 = arith.constant 0 : index
    %c0_13 = arith.constant 0 : index
    %15 = vector.load %arg3[%c0_12, %c0_13] : memref<256x256xbf16, #tpu.memory_space<vmem>>, vector<256x256xbf16>
    %cst_14 = arith.constant dense<0.000000e+00> : vector<16x256xf32>
    %16 = tpu.matmul %14, %15, %cst_14 {dimension_numbers = #tpu.dot_dimension_numbers<[1], [0], [0], [1], [0, 0, 1, 1], [], []>} : vector<16x256xbf16>, vector<256x256xbf16>, vector<16x256xf32> -> vector<16x256xf32>
    %17 = vector.broadcast %1 : vector<1x256xf32> to vector<16x256xf32>
    %18 = arith.addf %16, %17 : vector<16x256xf32>
    %cst_15 = arith.constant 0.000000e+00 : f32
    %19 = vector.broadcast %cst_15 : f32 to vector<16x256xf32>
    %20 = arith.maximumf %18, %19 : vector<16x256xf32>
    %21 = arith.truncf %20 : vector<16x256xf32> to vector<16x256xbf16>
    %c0_16 = arith.constant 0 : index
    %c0_17 = arith.constant 0 : index
    %22 = vector.load %arg4[%c0_16, %c0_17] : memref<256x256xbf16, #tpu.memory_space<vmem>>, vector<256x256xbf16>
    %cst_18 = arith.constant dense<0.000000e+00> : vector<16x256xf32>
    %23 = tpu.matmul %21, %22, %cst_18 {dimension_numbers = #tpu.dot_dimension_numbers<[1], [0], [0], [1], [0, 0, 1, 1], [], []>} : vector<16x256xbf16>, vector<256x256xbf16>, vector<16x256xf32> -> vector<16x256xf32>
    %c0_19 = arith.constant 0 : index
    %c0_20 = arith.constant 0 : index
    %24 = vector.load %arg5[%c0_19, %c0_20] : memref<256x256xbf16, #tpu.memory_space<vmem>>, vector<256x256xbf16>
    %cst_21 = arith.constant dense<0.000000e+00> : vector<16x256xf32>
    %25 = tpu.matmul %14, %24, %cst_21 {dimension_numbers = #tpu.dot_dimension_numbers<[1], [0], [0], [1], [0, 0, 1, 1], [], []>} : vector<16x256xbf16>, vector<256x256xbf16>, vector<16x256xf32> -> vector<16x256xf32>
    %26 = arith.addf %23, %25 : vector<16x256xf32>
    %27 = vector.broadcast %2 : vector<1x256xf32> to vector<16x256xf32>
    %28 = arith.addf %26, %27 : vector<16x256xf32>
    %cst_22 = arith.constant 0.000000e+00 : f32
    %29 = vector.broadcast %cst_22 : f32 to vector<16x256xf32>
    %30 = arith.maximumf %28, %29 : vector<16x256xf32>
    %31 = arith.truncf %30 : vector<16x256xf32> to vector<16x256xbf16>
    %c0_23 = arith.constant 0 : index
    %c0_24 = arith.constant 0 : index
    %32 = vector.load %arg6[%c0_23, %c0_24] : memref<256x256xbf16, #tpu.memory_space<vmem>>, vector<256x256xbf16>
    %cst_25 = arith.constant dense<0.000000e+00> : vector<16x256xf32>
    %33 = tpu.matmul %31, %32, %cst_25 {dimension_numbers = #tpu.dot_dimension_numbers<[1], [0], [0], [1], [0, 0, 1, 1], [], []>} : vector<16x256xbf16>, vector<256x256xbf16>, vector<16x256xf32> -> vector<16x256xf32>
    %34 = vector.broadcast %3 : vector<1x256xf32> to vector<16x256xf32>
    %35 = arith.addf %33, %34 : vector<16x256xf32>
    %cst_26 = arith.constant 0.000000e+00 : f32
    %36 = vector.broadcast %cst_26 : f32 to vector<16x256xf32>
    %37 = arith.maximumf %35, %36 : vector<16x256xf32>
    %38 = arith.truncf %37 : vector<16x256xf32> to vector<16x256xbf16>
    %c0_27 = arith.constant 0 : index
    %c0_28 = arith.constant 0 : index
    %39 = vector.load %arg7[%c0_27, %c0_28] : memref<256x256xbf16, #tpu.memory_space<vmem>>, vector<256x256xbf16>
    %cst_29 = arith.constant dense<0.000000e+00> : vector<16x256xf32>
    %40 = tpu.matmul %38, %39, %cst_29 {dimension_numbers = #tpu.dot_dimension_numbers<[1], [0], [0], [1], [0, 0, 1, 1], [], []>} : vector<16x256xbf16>, vector<256x256xbf16>, vector<16x256xf32> -> vector<16x256xf32>
    %c0_30 = arith.constant 0 : index
    %c0_31 = arith.constant 0 : index
    %41 = vector.load %arg8[%c0_30, %c0_31] : memref<256x256xbf16, #tpu.memory_space<vmem>>, vector<256x256xbf16>
    %cst_32 = arith.constant dense<0.000000e+00> : vector<16x256xf32>
    %42 = tpu.matmul %31, %41, %cst_32 {dimension_numbers = #tpu.dot_dimension_numbers<[1], [0], [0], [1], [0, 0, 1, 1], [], []>} : vector<16x256xbf16>, vector<256x256xbf16>, vector<16x256xf32> -> vector<16x256xf32>
    %43 = arith.addf %40, %42 : vector<16x256xf32>
    %44 = vector.broadcast %4 : vector<1x256xf32> to vector<16x256xf32>
    %45 = arith.addf %43, %44 : vector<16x256xf32>
    %cst_33 = arith.constant 0.000000e+00 : f32
    %46 = vector.broadcast %cst_33 : f32 to vector<16x256xf32>
    %47 = arith.maximumf %45, %46 : vector<16x256xf32>
    %48 = arith.truncf %47 : vector<16x256xf32> to vector<16x256xbf16>
    %c0_34 = arith.constant 0 : index
    %c0_35 = arith.constant 0 : index
    %49 = vector.load %arg9[%c0_34, %c0_35] : memref<256x128xbf16, #tpu.memory_space<vmem>>, vector<256x128xbf16>
    %cst_36 = arith.constant dense<0.000000e+00> : vector<16x128xf32>
    %50 = tpu.matmul %48, %49, %cst_36 {dimension_numbers = #tpu.dot_dimension_numbers<[1], [0], [0], [1], [0, 0, 1, 1], [], []>} : vector<16x256xbf16>, vector<256x128xbf16>, vector<16x128xf32> -> vector<16x128xf32>
    %51 = vector.broadcast %5 : vector<1x128xf32> to vector<16x128xf32>
    %52 = arith.addf %50, %51 : vector<16x128xf32>
    %cst_37 = arith.constant 0.000000e+00 : f32
    %53 = vector.broadcast %cst_37 : f32 to vector<16x128xf32>
    %54 = arith.maximumf %52, %53 : vector<16x128xf32>
    %55 = arith.truncf %54 : vector<16x128xf32> to vector<16x128xbf16>
    %c0_38 = arith.constant 0 : index
    %c0_39 = arith.constant 0 : index
    %56 = vector.load %arg10[%c0_38, %c0_39] : memref<128x128xbf16, #tpu.memory_space<vmem>>, vector<128x128xbf16>
    %cst_40 = arith.constant dense<0.000000e+00> : vector<16x128xf32>
    %57 = tpu.matmul %55, %56, %cst_40 {dimension_numbers = #tpu.dot_dimension_numbers<[1], [0], [0], [1], [0, 0, 1, 1], [], []>} : vector<16x128xbf16>, vector<128x128xbf16>, vector<16x128xf32> -> vector<16x128xf32>
    %58 = vector.broadcast %6 : vector<1x128xf32> to vector<16x128xf32>
    %59 = arith.addf %57, %58 : vector<16x128xf32>
    %c0_41 = arith.constant 0 : index
    %c0_42 = arith.constant 0 : index
    %60 = vector.load %arg12[%c0_41, %c0_42] : memref<16x128xf32, #tpu.memory_space<vmem>>, vector<16x128xf32>
    tpu.vector_store %arg12[%c0_41, %c0_42], %59 {strides = array<i32>} : memref<16x128xf32, #tpu.memory_space<vmem>>, vector<16x128xf32>,
    return
  }
  func.func @transform_0(%arg0: i32) -> (i32, i32) {
    %c0_i32 = arith.constant 0 : i32
    %c0_i32_0 = arith.constant 0 : i32
    return %arg0, %c0_i32 : i32, i32
  }
  func.func @transform_1(%arg0: i32) -> (i32, i32) {
    %c0_i32 = arith.constant 0 : i32
    %c0_i32_0 = arith.constant 0 : i32
    %c0_i32_1 = arith.constant 0 : i32
    return %c0_i32, %c0_i32_0 : i32, i32
  }
  func.func @transform_2(%arg0: i32) -> (i32, i32) {
    %c0_i32 = arith.constant 0 : i32
    %c0_i32_0 = arith.constant 0 : i32
    %c0_i32_1 = arith.constant 0 : i32
    return %c0_i32, %c0_i32_0 : i32, i32
  }
  func.func @transform_3(%arg0: i32) -> (i32, i32) {
    %c0_i32 = arith.constant 0 : i32
    %c0_i32_0 = arith.constant 0 : i32
    %c0_i32_1 = arith.constant 0 : i32
    return %c0_i32, %c0_i32_0 : i32, i32
  }
  func.func @transform_4(%arg0: i32) -> (i32, i32) {
    %c0_i32 = arith.constant 0 : i32
    %c0_i32_0 = arith.constant 0 : i32
    %c0_i32_1 = arith.constant 0 : i32
    return %c0_i32, %c0_i32_0 : i32, i32
  }
  func.func @transform_5(%arg0: i32) -> (i32, i32) {
    %c0_i32 = arith.constant 0 : i32
    %c0_i32_0 = arith.constant 0 : i32
    %c0_i32_1 = arith.constant 0 : i32
    return %c0_i32, %c0_i32_0 : i32, i32
  }
  func.func @transform_6(%arg0: i32) -> (i32, i32) {
    %c0_i32 = arith.constant 0 : i32
    %c0_i32_0 = arith.constant 0 : i32
    %c0_i32_1 = arith.constant 0 : i32
    return %c0_i32, %c0_i32_0 : i32, i32
  }
  func.func @transform_7(%arg0: i32) -> (i32, i32) {
    %c0_i32 = arith.constant 0 : i32
    %c0_i32_0 = arith.constant 0 : i32
    %c0_i32_1 = arith.constant 0 : i32
    return %c0_i32, %c0_i32_0 : i32, i32
  }
  func.func @transform_8(%arg0: i32) -> (i32, i32) {
    %c0_i32 = arith.constant 0 : i32
    %c0_i32_0 = arith.constant 0 : i32
    %c0_i32_1 = arith.constant 0 : i32
    return %c0_i32, %c0_i32_0 : i32, i32
  }
  func.func @transform_9(%arg0: i32) -> (i32, i32) {
    %c0_i32 = arith.constant 0 : i32
    %c0_i32_0 = arith.constant 0 : i32
    %c0_i32_1 = arith.constant 0 : i32
    return %c0_i32, %c0_i32_0 : i32, i32
  }
  func.func @transform_10(%arg0: i32) -> (i32, i32) {
    %c0_i32 = arith.constant 0 : i32
    %c0_i32_0 = arith.constant 0 : i32
    %c0_i32_1 = arith.constant 0 : i32
    return %c0_i32, %c0_i32_0 : i32, i32
  }
  func.func @transform_11(%arg0: i32) -> (i32, i32) {
    %c0_i32 = arith.constant 0 : i32
    %c0_i32_0 = arith.constant 0 : i32
    return %arg0, %c0_i32 : i32, i32
  }
}

</mosaic_0001>

<llo_original>
// kernel: tpu_custom_call.1
$region0: #{tpu_custom_call.1}
  #allocation0 [shape = 'u32[]', space=smem, size = 0x4, offset = 0x4, fixed_abs, tag = 'smem constant byte address 0x4 - core index']
  #allocation1 [shape = 'u32[144,128]{1,0:T(1,128)}', space=vmem, size = 0x12000, scoped, tag = 'internal scratch']
  %s0 = inlined_call_operand.hbm [shape: bf16[16,24], index: 0, kind: input, shape index: {}]
  %s1 = inlined_call_operand.hbm [shape: bf16[24,256], index: 1, kind: input, shape index: {}]
  %s2 = inlined_call_operand.hbm [shape: bf16[256,256], index: 2, kind: input, shape index: {}]
  %s3 = inlined_call_operand.hbm [shape: bf16[256,256], index: 3, kind: input, shape index: {}]
  %s4 = inlined_call_operand.hbm [shape: bf16[256,256], index: 4, kind: input, shape index: {}]
  %s5 = inlined_call_operand.hbm [shape: bf16[256,256], index: 5, kind: input, shape index: {}]
  %s6 = inlined_call_operand.hbm [shape: bf16[256,256], index: 6, kind: input, shape index: {}]
  %s7 = inlined_call_operand.hbm [shape: bf16[256,256], index: 7, kind: input, shape index: {}]
  %s8 = inlined_call_operand.hbm [shape: bf16[256,128], index: 8, kind: input, shape index: {}]
  %s9 = inlined_call_operand.hbm [shape: bf16[128,128], index: 9, kind: input, shape index: {}]
  %s10 = inlined_call_operand.vmem [shape: f32[7,256], index: 10, kind: input, shape index: {}]
  %s11 = inlined_call_operand.hbm [shape: f32[16,128], index: 11, kind: output, shape index: {}]
  %s12 = sld [smem:[#allocation0]]
  $region94: #{tpu_custom_call.1} parent=0
    _
  %s14 = ssub.s32 1, %s12
  %s15 = scalar_select 0, %s14, %s12
  $region1: #{tpu_custom_call.1} parent=0
    #allocation2 [shape = 'u8[4096]{0}', space=vmem, size = 0x1000, scoped, tag = 'input window, operand 0, single buffered']
    #allocation3 [shape = 's32[1]{0}', space=sflag, size = 0x4, scoped, tag = 'scoped memory for tpu_custom_call.1']
    #allocation4 [shape = 's32[1]{0}', space=sflag, size = 0x4, scoped, tag = 'scoped memory for tpu_custom_call.1']
    #allocation5 [shape = 'u8[12288]{0}', space=vmem, size = 0x3000, scoped, tag = 'input window, operand 1, single buffered']
    #allocation6 [shape = 's32[1]{0}', space=sflag, size = 0x4, scoped, tag = 'scoped memory for tpu_custom_call.1']
    #allocation7 [shape = 'u8[131072]{0}', space=vmem, size = 0x20000, scoped, tag = 'input window, operand 2, single buffered']
    #allocation8 [shape = 'u8[131072]{0}', space=vmem, size = 0x20000, scoped, tag = 'input window, operand 3, single buffered']
    #allocation9 [shape = 's32[1]{0}', space=sflag, size = 0x4, scoped, tag = 'scoped memory for tpu_custom_call.1']
    #allocation10 [shape = 'u8[131072]{0}', space=vmem, size = 0x20000, scoped, tag = 'input window, operand 4, single buffered']
    #allocation11 [shape = 'u8[131072]{0}', space=vmem, size = 0x20000, scoped, tag = 'input window, operand 5, single buffered']
    #allocation12 [shape = 's32[1]{0}', space=sflag, size = 0x4, scoped, tag = 'scoped memory for tpu_custom_call.1']
    #allocation13 [shape = 'u8[131072]{0}', space=vmem, size = 0x20000, scoped, tag = 'input window, operand 6, single buffered']
    #allocation14 [shape = 'u8[131072]{0}', space=vmem, size = 0x20000, scoped, tag = 'input window, operand 7, single buffered']
    #allocation15 [shape = 's32[1]{0}', space=sflag, size = 0x4, scoped, tag = 'scoped memory for tpu_custom_call.1']
    #allocation16 [shape = 'u8[65536]{0}', space=vmem, size = 0x10000, scoped, tag = 'input window, operand 8, single buffered']
    #allocation17 [shape = 'u8[32768]{0}', space=vmem, size = 0x8000, scoped, tag = 'input window, operand 9, single buffered']
    #allocation18 [shape = 's32[1]{0}', space=sflag, size = 0x4, scoped, tag = 'scoped memory for tpu_custom_call.1']
    #allocation19 [shape = 'u8[8192]{0}', space=vmem, size = 0x2000, scoped, tag = 'output window, operand 0, single buffered']
    %16 = vsyncpa [#allocation3], 0
    %17 = vsyncpa [#allocation6], 0
    %18 = vsyncpa [#allocation9], 0
    %19 = vsyncpa [#allocation12], 0
    %20 = vsyncpa [#allocation15], 0
    %21 = vsyncpa [#allocation18], 0
    %22 = vsyncpa [#allocation4], 0
    // Predicated region
    $region2: #{tpu_custom_call.1} parent=1 // pred_check
      _
    $region3: #{tpu_custom_call.1} parent=1 // pred_check_branch
      %24 = sbr.rel (0) target = $region5
    $region4: #{tpu_custom_call.1} parent=1 // pred_region
      %s26 = ssub.s32 128, 128
      %27 = vsyncadd [#allocation3], %s26
      %s28 = sshll.u32 [#allocation2], 4
      %s29 = int_to_ptr.vmem [resolvable:$true] %s28
      %34 = dma.hbm_to_vmem [thread:$0]  %s0, 128, %s29, [#allocation3], 64, 64, 4
    $region5: #{tpu_custom_call.1} parent=1 // pred_fallthru
      _
    // Predicated region
    $region6: #{tpu_custom_call.1} parent=1 // pred_check
      _
    $region7: #{tpu_custom_call.1} parent=1 // pred_check_branch
      %36 = sbr.rel (0) target = $region9
    $region8: #{tpu_custom_call.1} parent=1 // pred_region
      %s38 = ssub.s32 384, 384
      %39 = vsyncadd [#allocation6], %s38
      %s40 = sshll.u32 [#allocation5], 4
      %s41 = int_to_ptr.vmem [resolvable:$true] %s40
      %46 = dma.hbm_to_vmem [thread:$0]  %s1, 384, %s41, [#allocation6], 128, 128, 8
    $region9: #{tpu_custom_call.1} parent=1 // pred_fallthru
      _
    // Predicated region
    $region10: #{tpu_custom_call.1} parent=1 // pred_check
      _
    $region11: #{tpu_custom_call.1} parent=1 // pred_check_branch
      %48 = sbr.rel (0) target = $region13
    $region12: #{tpu_custom_call.1} parent=1 // pred_region
      %s50 = ssub.s32 4096, 4096
      %51 = vsyncadd [#allocation6], %s50
      %s52 = sshll.u32 [#allocation7], 4
      %s53 = int_to_ptr.vmem [resolvable:$true] %s52
      %58 = dma.hbm_to_vmem [thread:$0]  %s2, 4096, %s53, [#allocation6], 128, 128, 8
    $region13: #{tpu_custom_call.1} parent=1 // pred_fallthru
      _
    // Predicated region
    $region14: #{tpu_custom_call.1} parent=1 // pred_check
      _
    $region15: #{tpu_custom_call.1} parent=1 // pred_check_branch
      %60 = sbr.rel (0) target = $region17
    $region16: #{tpu_custom_call.1} parent=1 // pred_region
      %s62 = ssub.s32 4096, 4096
      %63 = vsyncadd [#allocation9], %s62
      %s64 = sshll.u32 [#allocation8], 4
      %s65 = int_to_ptr.vmem [resolvable:$true] %s64
      %70 = dma.hbm_to_vmem [thread:$0]  %s3, 4096, %s65, [#allocation9], 128, 128, 8
    $region17: #{tpu_custom_call.1} parent=1 // pred_fallthru
      _
    // Predicated region
    $region18: #{tpu_custom_call.1} parent=1 // pred_check
      _
    $region19: #{tpu_custom_call.1} parent=1 // pred_check_branch
      %72 = sbr.rel (0) target = $region21
    $region20: #{tpu_custom_call.1} parent=1 // pred_region
      %s74 = ssub.s32 4096, 4096
      %75 = vsyncadd [#allocation9], %s74
      %s76 = sshll.u32 [#allocation10], 4
      %s77 = int_to_ptr.vmem [resolvable:$true] %s76
      %82 = dma.hbm_to_vmem [thread:$0]  %s4, 4096, %s77, [#allocation9], 128, 128, 8
    $region21: #{tpu_custom_call.1} parent=1 // pred_fallthru
      _
    // Predicated region
    $region22: #{tpu_custom_call.1} parent=1 // pred_check
      _
    $region23: #{tpu_custom_call.1} parent=1 // pred_check_branch
      %84 = sbr.rel (0) target = $region25
    $region24: #{tpu_custom_call.1} parent=1 // pred_region
      %s86 = ssub.s32 4096, 4096
      %87 = vsyncadd [#allocation12], %s86
      %s88 = sshll.u32 [#allocation11], 4
      %s89 = int_to_ptr.vmem [resolvable:$true] %s88
      %94 = dma.hbm_to_vmem [thread:$0]  %s5, 4096, %s89, [#allocation12], 128, 128, 8
    $region25: #{tpu_custom_call.1} parent=1 // pred_fallthru
      _
    // Predicated region
    $region26: #{tpu_custom_call.1} parent=1 // pred_check
      _
    $region27: #{tpu_custom_call.1} parent=1 // pred_check_branch
      %96 = sbr.rel (0) target = $region29
    $region28: #{tpu_custom_call.1} parent=1 // pred_region
      %s98 = ssub.s32 4096, 4096
      %99 = vsyncadd [#allocation12], %s98
      %s100 = sshll.u32 [#allocation13], 4
      %s101 = int_to_ptr.vmem [resolvable:$true] %s100
      %106 = dma.hbm_to_vmem [thread:$0]  %s6, 4096, %s101, [#allocation12], 128, 128, 8
    $region29: #{tpu_custom_call.1} parent=1 // pred_fallthru
      _
    // Predicated region
    $region30: #{tpu_custom_call.1} parent=1 // pred_check
      _
    $region31: #{tpu_custom_call.1} parent=1 // pred_check_branch
      %108 = sbr.rel (0) target = $region33
    $region32: #{tpu_custom_call.1} parent=1 // pred_region
      %s110 = ssub.s32 4096, 4096
      %111 = vsyncadd [#allocation15], %s110
      %s112 = sshll.u32 [#allocation14], 4
      %s113 = int_to_ptr.vmem [resolvable:$true] %s112
      %118 = dma.hbm_to_vmem [thread:$0]  %s7, 4096, %s113, [#allocation15], 128, 128, 8
    $region33: #{tpu_custom_call.1} parent=1 // pred_fallthru
      _
    // Predicated region
    $region34: #{tpu_custom_call.1} parent=1 // pred_check
      _
    $region35: #{tpu_custom_call.1} parent=1 // pred_check_branch
      %120 = sbr.rel (0) target = $region37
    $region36: #{tpu_custom_call.1} parent=1 // pred_region
      %s122 = ssub.s32 2048, 2048
      %123 = vsyncadd [#allocation15], %s122
      %s124 = sshll.u32 [#allocation16], 4
      %s125 = int_to_ptr.vmem [resolvable:$true] %s124
      %130 = dma.hbm_to_vmem [thread:$0]  %s8, 2048, %s125, [#allocation15], 64, 64, 4
    $region37: #{tpu_custom_call.1} parent=1 // pred_fallthru
      _
    // Predicated region
    $region38: #{tpu_custom_call.1} parent=1 // pred_check
      _
    $region39: #{tpu_custom_call.1} parent=1 // pred_check_branch
      %132 = sbr.rel (0) target = $region41
    $region40: #{tpu_custom_call.1} parent=1 // pred_region
      %s134 = ssub.s32 1024, 1024
      %135 = vsyncadd [#allocation18], %s134
      %s136 = sshll.u32 [#allocation17], 4
      %s137 = int_to_ptr.vmem [resolvable:$true] %s136
      %142 = dma.hbm_to_vmem [thread:$0]  %s9, 1024, %s137, [#allocation18], 64, 64, 4
    $region41: #{tpu_custom_call.1} parent=1 // pred_fallthru
      _
    // Predicated region
    $region42: #{tpu_custom_call.1} parent=1 // pred_check
      _
    $region43: #{tpu_custom_call.1} parent=1 // pred_check_branch
      %144 = sbr.rel (0) target = $region45
    $region44: #{tpu_custom_call.1} parent=1 // pred_region
      _
    $region45: #{tpu_custom_call.1} parent=1 // pred_fallthru
      _
    // Predicated region
    $region46: #{tpu_custom_call.1} parent=1 // pred_check
      _
    $region47: #{tpu_custom_call.1} parent=1 // pred_check_branch
      %146 = sbr.rel (0) target = $region49
    $region48: #{tpu_custom_call.1} parent=1 // pred_region
      %147 = dma.done [#allocation3], 128
    $region49: #{tpu_custom_call.1} parent=1 // pred_fallthru
      _
    // Predicated region
    $region50: #{tpu_custom_call.1} parent=1 // pred_check
      _
    $region51: #{tpu_custom_call.1} parent=1 // pred_check_branch
      %149 = sbr.rel (0) target = $region53
    $region52: #{tpu_custom_call.1} parent=1 // pred_region
      %150 = dma.done [#allocation6], 384
    $region53: #{tpu_custom_call.1} parent=1 // pred_fallthru
      _
    // Predicated region
    $region54: #{tpu_custom_call.1} parent=1 // pred_check
      _
    $region55: #{tpu_custom_call.1} parent=1 // pred_check_branch
      %152 = sbr.rel (0) target = $region57
    $region56: #{tpu_custom_call.1} parent=1 // pred_region
      %153 = dma.done [#allocation6], 4096
    $region57: #{tpu_custom_call.1} parent=1 // pred_fallthru
      _
    // Predicated region
    $region58: #{tpu_custom_call.1} parent=1 // pred_check
      _
    $region59: #{tpu_custom_call.1} parent=1 // pred_check_branch
      %155 = sbr.rel (0) target = $region61
    $region60: #{tpu_custom_call.1} parent=1 // pred_region
      %156 = dma.done [#allocation9], 4096
    $region61: #{tpu_custom_call.1} parent=1 // pred_fallthru
      _
    // Predicated region
    $region62: #{tpu_custom_call.1} parent=1 // pred_check
      _
    $region63: #{tpu_custom_call.1} parent=1 // pred_check_branch
      %158 = sbr.rel (0) target = $region65
    $region64: #{tpu_custom_call.1} parent=1 // pred_region
      %159 = dma.done [#allocation9], 4096
    $region65: #{tpu_custom_call.1} parent=1 // pred_fallthru
      _
    // Predicated region
    $region66: #{tpu_custom_call.1} parent=1 // pred_check
      _
    $region67: #{tpu_custom_call.1} parent=1 // pred_check_branch
      %161 = sbr.rel (0) target = $region69
    $region68: #{tpu_custom_call.1} parent=1 // pred_region
      %162 = dma.done [#allocation12], 4096
    $region69: #{tpu_custom_call.1} parent=1 // pred_fallthru
      _
    // Predicated region
    $region70: #{tpu_custom_call.1} parent=1 // pred_check
      _
    $region71: #{tpu_custom_call.1} parent=1 // pred_check_branch
      %164 = sbr.rel (0) target = $region73
    $region72: #{tpu_custom_call.1} parent=1 // pred_region
      %165 = dma.done [#allocation12], 4096
    $region73: #{tpu_custom_call.1} parent=1 // pred_fallthru
      _
    // Predicated region
    $region74: #{tpu_custom_call.1} parent=1 // pred_check
      _
    $region75: #{tpu_custom_call.1} parent=1 // pred_check_branch
      %167 = sbr.rel (0) target = $region77
    $region76: #{tpu_custom_call.1} parent=1 // pred_region
      %168 = dma.done [#allocation15], 4096
    $region77: #{tpu_custom_call.1} parent=1 // pred_fallthru
      _
    // Predicated region
    $region78: #{tpu_custom_call.1} parent=1 // pred_check
      _
    $region79: #{tpu_custom_call.1} parent=1 // pred_check_branch
      %170 = sbr.rel (0) target = $region81
    $region80: #{tpu_custom_call.1} parent=1 // pred_region
      %171 = dma.done [#allocation15], 2048
    $region81: #{tpu_custom_call.1} parent=1 // pred_fallthru
      _
    // Predicated region
    $region82: #{tpu_custom_call.1} parent=1 // pred_check
      _
    $region83: #{tpu_custom_call.1} parent=1 // pred_check_branch
      %173 = sbr.rel (0) target = $region85
    $region84: #{tpu_custom_call.1} parent=1 // pred_region
      %174 = dma.done [#allocation18], 1024
    $region85: #{tpu_custom_call.1} parent=1 // pred_fallthru
      _
    %v176 = vld [vmem:[%s10] ss:$8 sm:$0x3]
    %s177 = scalar_lea.vmem %s10, 1
    %v178 = vld [vmem:[%s177] ss:$8 sm:$0x3]
    %s179 = scalar_lea.vmem %s10, 2
    %v180 = vld [vmem:[%s179] ss:$8 sm:$0x3]
    %s181 = scalar_lea.vmem %s10, 3
    %v182 = vld [vmem:[%s181] ss:$8 sm:$0x3]
    %s183 = scalar_lea.vmem %s10, 4
    %v184 = vld [vmem:[%s183] ss:$8 sm:$0x3]
    %v185 = vld [vmem:[%s10 + $0x5] ss:$0 sm:$0xff]
    %v186 = vld [vmem:[%s10 + $0x6] ss:$0 sm:$0xff]
    %v187 = vld [vmem:[#allocation2] sm:$0xf]
    %v188 = vld [vmem:[#allocation2 + $0x4] sm:$0xf]
    %v189 = vld [vmem:[#allocation5] sm:$0xff]
    %v190 = vld [vmem:[#allocation5 + $0x8] sm:$0xff]
    %v191 = vld [vmem:[#allocation5 + $0x10] sm:$0xff]
    %v193 = vlaneseq
    %v194 = vshrl.u32 %v193, 7
    %v195 = vsub.s32 0, %v194
    %v196 = vrot.slane %v176, %v195
    %v197 = vlaneseq
    %v198 = vshrl.u32 %v197, 7
    %v199 = vsub.s32 1, %v198
    %v200 = vrot.slane %v176, %v199
    %v205 = vunpack.c.l.b16 %v187
    %v206 = vunpack.c.l.b16 %v188
    %v207 = vpack.c.b16 %v206, %v205
    %v211 = vunpack.c.l.b16 %v189
    %v212 = vunpack.c.h.b16 %v189
    %v213 = vunpack.c.l.b16 %v190
    %v214 = vunpack.c.h.b16 %v190
    %v215 = vunpack.c.l.b16 %v191
    %v216 = vunpack.c.h.b16 %v191
    %v217 = vpack.c.b16 %v213, %v211
    %v218 = vpack.c.b16 %v214, %v212
    %v219 = vpack.c.b16 %v215, %v215
    %v220 = vpack.c.b16 %v216, %v216
    %vm223 = vcmask 195584
    %v225 = vsel %vm223, %v207, 0
    %vm227 = vcmask 1043456
    %v229 = vsel %vm227, %v219, 0
    %v232 = vsel %vm227, %v220, 0
    %234 = vmatprep.subr.bf16.mxu0 0
    %235 = vmatpush1.bf16.msra.mxu0 0
    %236 = vmatprep.subr.bf16.mxu0 0
    %237 = vmatpush1.bf16.msra.mxu0 0
    %238 = vmatprep.subr.bf16.mxu0 0
    %239 = vmatpush1.bf16.msra.mxu0 0
    %240 = vmatprep.subr.bf16.mxu0 0
    %241 = vmatpush1.bf16.msra.mxu0 0
    %242 = vmatprep.subr.bf16.mxu0 0
    %243 = vmatpush1.bf16.msra.mxu0 0
    %244 = vmatprep.subr.bf16.mxu0 0
    %245 = vmatpush1.bf16.msra.mxu0 0
    %246 = vmatprep.subr.bf16.mxu0 %v232
    %247 = vmatpush1.bf16.msra.mxu0 %v229
    %248 = vmatprep.subr.bf16.mxu0 %v218
    %249 = vmatpush1.bf16.msra.mxu0 %v217
    %250 = vmatprep.subr.bf16.mxu0 0
    %251 = vmatpush2.bf16.msra.mxu0 0
    %252 = vmatprep.subr.bf16.mxu0 0
    %253 = vmatpush2.bf16.msra.mxu0 0
    %254 = vmatprep.subr.bf16.mxu0 0
    %255 = vmatpush2.bf16.msra.mxu0 0
    %256 = vmatprep.subr.bf16.mxu0 0
    %257 = vmatpush2.bf16.msra.mxu0 0
    %258 = vmatprep.subr.bf16.mxu0 0
    %259 = vmatpush2.bf16.msra.mxu0 0
    %260 = vmatprep.subr.bf16.mxu0 0
    %261 = vmatpush2.bf16.msra.mxu0 0
    %262 = vmatprep.subr.bf16.mxu0 0
    %263 = vmatpush2.bf16.msra.mxu0 0
    %264 = vmatprep.subr.bf16.mxu0 0
    %265 = vmatpush2.bf16.msra.mxu0 0
    %266 = vmatprep.mubr.bf16.mxu0 0
    %267 = vmatmul.mubr.bf16.gmra.mxu0 %v225
    %v268 = vpop.f32.mrf.mxu0
    %v269 = vadd.f32 %v196, %v268
    %v270 = vpop.f32.mrf.mxu0
    %v271 = vadd.f32 %v200, %v270
    %v272 = vpop.f32.mrf.mxu0
    %v273 = vadd.f32 %v196, %v272
    %v274 = vpop.f32.mrf.mxu0
    %v275 = vadd.f32 %v200, %v274
    %276 = vdwg.mxu0
    %v277 = vmax.f32 %v269, 0.0
    %v278 = vmax.f32 %v271, 0.0
    %v279 = vmax.f32 %v273, 0.0
    %v280 = vmax.f32 %v275, 0.0
    %v281 = vpack.c.bf16 %v279, %v277
    %v282 = vpack.c.bf16 %v280, %v278
    %v283 = vld [vmem:[#allocation7] sm:$0xff]
    %v284 = vld [vmem:[#allocation7 + $0x8] sm:$0xff]
    %v285 = vld [vmem:[#allocation7 + $0x10] sm:$0xff]
    %v286 = vld [vmem:[#allocation7 + $0x18] sm:$0xff]
    %v287 = vld [vmem:[#allocation7 + $0x20] sm:$0xff]
    %v288 = vld [vmem:[#allocation7 + $0x28] sm:$0xff]
    %v289 = vld [vmem:[#allocation7 + $0x30] sm:$0xff]
    %v290 = vld [vmem:[#allocation7 + $0x38] sm:$0xff]
    %v291 = vld [vmem:[#allocation7 + $0x40] sm:$0xff]
    %v292 = vld [vmem:[#allocation7 + $0x48] sm:$0xff]
    %v293 = vld [vmem:[#allocation7 + $0x50] sm:$0xff]
    %v294 = vld [vmem:[#allocation7 + $0x58] sm:$0xff]
    %v295 = vld [vmem:[#allocation7 + $0x60] sm:$0xff]
    %v296 = vld [vmem:[#allocation7 + $0x68] sm:$0xff]
    %v297 = vld [vmem:[#allocation7 + $0x70] sm:$0xff]
    %v298 = vld [vmem:[#allocation7 + $0x78] sm:$0xff]
    %v299 = vld [vmem:[#allocation7 + $0x80] sm:$0xff]
    %v300 = vld [vmem:[#allocation7 + $0x88] sm:$0xff]
    %v301 = vld [vmem:[#allocation7 + $0x90] sm:$0xff]
    %v302 = vld [vmem:[#allocation7 + $0x98] sm:$0xff]
    %v303 = vld [vmem:[#allocation7 + $0xa0] sm:$0xff]
    %v304 = vld [vmem:[#allocation7 + $0xa8] sm:$0xff]
    %v305 = vld [vmem:[#allocation7 + $0xb0] sm:$0xff]
    %v306 = vld [vmem:[#allocation7 + $0xb8] sm:$0xff]
    %v307 = vld [vmem:[#allocation7 + $0xc0] sm:$0xff]
    %v308 = vld [vmem:[#allocation7 + $0xc8] sm:$0xff]
    %v309 = vld [vmem:[#allocation7 + $0xd0] sm:$0xff]
    %v310 = vld [vmem:[#allocation7 + $0xd8] sm:$0xff]
    %v311 = vld [vmem:[#allocation7 + $0xe0] sm:$0xff]
    %v312 = vld [vmem:[#allocation7 + $0xe8] sm:$0xff]
    %v313 = vld [vmem:[#allocation7 + $0xf0] sm:$0xff]
    %v314 = vld [vmem:[#allocation7 + $0xf8] sm:$0xff]
    %v316 = vlaneseq
    %v317 = vshrl.u32 %v316, 7
    %v318 = vsub.s32 0, %v317
    %v319 = vrot.slane %v178, %v318
    %v320 = vlaneseq
    %v321 = vshrl.u32 %v320, 7
    %v322 = vsub.s32 1, %v321
    %v323 = vrot.slane %v178, %v322
    %v358 = vunpack.c.l.b16 %v283
    %v359 = vunpack.c.h.b16 %v283
    %v360 = vunpack.c.l.b16 %v284
    %v361 = vunpack.c.h.b16 %v284
    %v362 = vunpack.c.l.b16 %v285
    %v363 = vunpack.c.h.b16 %v285
    %v364 = vunpack.c.l.b16 %v286
    %v365 = vunpack.c.h.b16 %v286
    %v366 = vunpack.c.l.b16 %v287
    %v367 = vunpack.c.h.b16 %v287
    %v368 = vunpack.c.l.b16 %v288
    %v369 = vunpack.c.h.b16 %v288
    %v370 = vunpack.c.l.b16 %v289
    %v371 = vunpack.c.h.b16 %v289
    %v372 = vunpack.c.l.b16 %v290
    %v373 = vunpack.c.h.b16 %v290
    %v374 = vunpack.c.l.b16 %v291
    %v375 = vunpack.c.h.b16 %v291
    %v376 = vunpack.c.l.b16 %v292
    %v377 = vunpack.c.h.b16 %v292
    %v378 = vunpack.c.l.b16 %v293
    %v379 = vunpack.c.h.b16 %v293
    %v380 = vunpack.c.l.b16 %v294
    %v381 = vunpack.c.h.b16 %v294
    %v382 = vunpack.c.l.b16 %v295
    %v383 = vunpack.c.h.b16 %v295
    %v384 = vunpack.c.l.b16 %v296
    %v385 = vunpack.c.h.b16 %v296
    %v386 = vunpack.c.l.b16 %v297
    %v387 = vunpack.c.h.b16 %v297
    %v388 = vunpack.c.l.b16 %v298
    %v389 = vunpack.c.h.b16 %v298
    %v390 = vunpack.c.l.b16 %v299
    %v391 = vunpack.c.h.b16 %v299
    %v392 = vunpack.c.l.b16 %v300
    %v393 = vunpack.c.h.b16 %v300
    %v394 = vunpack.c.l.b16 %v301
    %v395 = vunpack.c.h.b16 %v301
    %v396 = vunpack.c.l.b16 %v302
    %v397 = vunpack.c.h.b16 %v302
    %v398 = vunpack.c.l.b16 %v303
    %v399 = vunpack.c.h.b16 %v303
    %v400 = vunpack.c.l.b16 %v304
    %v401 = vunpack.c.h.b16 %v304
    %v402 = vunpack.c.l.b16 %v305
    %v403 = vunpack.c.h.b16 %v305
    %v404 = vunpack.c.l.b16 %v306
    %v405 = vunpack.c.h.b16 %v306
    %v406 = vunpack.c.l.b16 %v307
    %v407 = vunpack.c.h.b16 %v307
    %v408 = vunpack.c.l.b16 %v308
    %v409 = vunpack.c.h.b16 %v308
    %v410 = vunpack.c.l.b16 %v309
    %v411 = vunpack.c.h.b16 %v309
    %v412 = vunpack.c.l.b16 %v310
    %v413 = vunpack.c.h.b16 %v310
    %v414 = vunpack.c.l.b16 %v311
    %v415 = vunpack.c.h.b16 %v311
    %v416 = vunpack.c.l.b16 %v312
    %v417 = vunpack.c.h.b16 %v312
    %v418 = vunpack.c.l.b16 %v313
    %v419 = vunpack.c.h.b16 %v313
    %v420 = vunpack.c.l.b16 %v314
    %v421 = vunpack.c.h.b16 %v314
    %v422 = vpack.c.b16 %v360, %v358
    %v423 = vpack.c.b16 %v361, %v359
    %v424 = vpack.c.b16 %v364, %v362
    %v425 = vpack.c.b16 %v365, %v363
    %v426 = vpack.c.b16 %v368, %v366
    %v427 = vpack.c.b16 %v369, %v367
    %v428 = vpack.c.b16 %v372, %v370
    %v429 = vpack.c.b16 %v373, %v371
    %v430 = vpack.c.b16 %v376, %v374
    %v431 = vpack.c.b16 %v377, %v375
    %v432 = vpack.c.b16 %v380, %v378
    %v433 = vpack.c.b16 %v381, %v379
    %v434 = vpack.c.b16 %v384, %v382
    %v435 = vpack.c.b16 %v385, %v383
    %v436 = vpack.c.b16 %v388, %v386
    %v437 = vpack.c.b16 %v389, %v387
    %v438 = vpack.c.b16 %v392, %v390
    %v439 = vpack.c.b16 %v393, %v391
    %v440 = vpack.c.b16 %v396, %v394
    %v441 = vpack.c.b16 %v397, %v395
    %v442 = vpack.c.b16 %v400, %v398
    %v443 = vpack.c.b16 %v401, %v399
    %v444 = vpack.c.b16 %v404, %v402
    %v445 = vpack.c.b16 %v405, %v403
    %v446 = vpack.c.b16 %v408, %v406
    %v447 = vpack.c.b16 %v409, %v407
    %v448 = vpack.c.b16 %v412, %v410
    %v449 = vpack.c.b16 %v413, %v411
    %v450 = vpack.c.b16 %v416, %v414
    %v451 = vpack.c.b16 %v417, %v415
    %v452 = vpack.c.b16 %v420, %v418
    %v453 = vpack.c.b16 %v421, %v419
    %486 = vmatprep.subr.bf16.mxu0 %v437
    %487 = vmatpush1.bf16.msra.mxu0 %v436
    %488 = vmatprep.subr.bf16.mxu0 %v435
    %489 = vmatpush1.bf16.msra.mxu0 %v434
    %490 = vmatprep.subr.bf16.mxu0 %v433
    %491 = vmatpush1.bf16.msra.mxu0 %v432
    %492 = vmatprep.subr.bf16.mxu0 %v431
    %493 = vmatpush1.bf16.msra.mxu0 %v430
    %494 = vmatprep.subr.bf16.mxu0 %v429
    %495 = vmatpush1.bf16.msra.mxu0 %v428
    %496 = vmatprep.subr.bf16.mxu0 %v427
    %497 = vmatpush1.bf16.msra.mxu0 %v426
    %498 = vmatprep.subr.bf16.mxu0 %v425
    %499 = vmatpush1.bf16.msra.mxu0 %v424
    %500 = vmatprep.subr.bf16.mxu0 %v423
    %501 = vmatpush1.bf16.msra.mxu0 %v422
    %502 = vmatprep.subr.bf16.mxu0 %v453
    %503 = vmatpush2.bf16.msra.mxu0 %v452
    %504 = vmatprep.subr.bf16.mxu0 %v451
    %505 = vmatpush2.bf16.msra.mxu0 %v450
    %506 = vmatprep.subr.bf16.mxu0 %v449
    %507 = vmatpush2.bf16.msra.mxu0 %v448
    %508 = vmatprep.subr.bf16.mxu0 %v447
    %509 = vmatpush2.bf16.msra.mxu0 %v446
    %510 = vmatprep.subr.bf16.mxu0 %v445
    %511 = vmatpush2.bf16.msra.mxu0 %v444
    %512 = vmatprep.subr.bf16.mxu0 %v443
    %513 = vmatpush2.bf16.msra.mxu0 %v442
    %514 = vmatprep.subr.bf16.mxu0 %v441
    %515 = vmatpush2.bf16.msra.mxu0 %v440
    %516 = vmatprep.subr.bf16.mxu0 %v439
    %517 = vmatpush2.bf16.msra.mxu0 %v438
    %518 = vmatprep.mubr.bf16.mxu0 %v282
    %519 = vmatmul.mubr.bf16.gmra.mxu0 %v281
    %v520 = vpop.f32.mrf.mxu0
    %v521 = vadd.f32 %v319, %v520
    %v522 = vpop.f32.mrf.mxu0
    %v523 = vadd.f32 %v323, %v522
    %v524 = vpop.f32.mrf.mxu0
    %v525 = vadd.f32 %v319, %v524
    %v526 = vpop.f32.mrf.mxu0
    %v527 = vadd.f32 %v323, %v526
    %528 = vdwg.mxu0
    %v529 = vmax.f32 %v521, 0.0
    %v530 = vmax.f32 %v523, 0.0
    %v531 = vmax.f32 %v525, 0.0
    %v532 = vmax.f32 %v527, 0.0
    %v533 = vpack.c.bf16 %v531, %v529
    %v534 = vpack.c.bf16 %v532, %v530
    %v535 = vld [vmem:[#allocation8] sm:$0xff]
    %v536 = vld [vmem:[#allocation8 + $0x8] sm:$0xff]
    %v537 = vld [vmem:[#allocation8 + $0x10] sm:$0xff]
    %v538 = vld [vmem:[#allocation8 + $0x18] sm:$0xff]
    %v539 = vld [vmem:[#allocation8 + $0x20] sm:$0xff]
    %v540 = vld [vmem:[#allocation8 + $0x28] sm:$0xff]
    %v541 = vld [vmem:[#allocation8 + $0x30] sm:$0xff]
    %v542 = vld [vmem:[#allocation8 + $0x38] sm:$0xff]
    %v543 = vld [vmem:[#allocation8 + $0x40] sm:$0xff]
    %v544 = vld [vmem:[#allocation8 + $0x48] sm:$0xff]
    %v545 = vld [vmem:[#allocation8 + $0x50] sm:$0xff]
    %v546 = vld [vmem:[#allocation8 + $0x58] sm:$0xff]
    %v547 = vld [vmem:[#allocation8 + $0x60] sm:$0xff]
    %v548 = vld [vmem:[#allocation8 + $0x68] sm:$0xff]
    %v549 = vld [vmem:[#allocation8 + $0x70] sm:$0xff]
    %v550 = vld [vmem:[#allocation8 + $0x78] sm:$0xff]
    %v551 = vld [vmem:[#allocation8 + $0x80] sm:$0xff]
    %v552 = vld [vmem:[#allocation8 + $0x88] sm:$0xff]
    %v553 = vld [vmem:[#allocation8 + $0x90] sm:$0xff]
    %v554 = vld [vmem:[#allocation8 + $0x98] sm:$0xff]
    %v555 = vld [vmem:[#allocation8 + $0xa0] sm:$0xff]
    %v556 = vld [vmem:[#allocation8 + $0xa8] sm:$0xff]
    %v557 = vld [vmem:[#allocation8 + $0xb0] sm:$0xff]
    %v558 = vld [vmem:[#allocation8 + $0xb8] sm:$0xff]
    %v559 = vld [vmem:[#allocation8 + $0xc0] sm:$0xff]
    %v560 = vld [vmem:[#allocation8 + $0xc8] sm:$0xff]
    %v561 = vld [vmem:[#allocation8 + $0xd0] sm:$0xff]
    %v562 = vld [vmem:[#allocation8 + $0xd8] sm:$0xff]
    %v563 = vld [vmem:[#allocation8 + $0xe0] sm:$0xff]
    %v564 = vld [vmem:[#allocation8 + $0xe8] sm:$0xff]
    %v565 = vld [vmem:[#allocation8 + $0xf0] sm:$0xff]
    %v566 = vld [vmem:[#allocation8 + $0xf8] sm:$0xff]
    %v567 = vld [vmem:[#allocation10] sm:$0xff]
    %v568 = vld [vmem:[#allocation10 + $0x8] sm:$0xff]
    %v569 = vld [vmem:[#allocation10 + $0x10] sm:$0xff]
    %v570 = vld [vmem:[#allocation10 + $0x18] sm:$0xff]
    %v571 = vld [vmem:[#allocation10 + $0x20] sm:$0xff]
    %v572 = vld [vmem:[#allocation10 + $0x28] sm:$0xff]
    %v573 = vld [vmem:[#allocation10 + $0x30] sm:$0xff]
    %v574 = vld [vmem:[#allocation10 + $0x38] sm:$0xff]
    %v575 = vld [vmem:[#allocation10 + $0x40] sm:$0xff]
    %v576 = vld [vmem:[#allocation10 + $0x48] sm:$0xff]
    %v577 = vld [vmem:[#allocation10 + $0x50] sm:$0xff]
    %v578 = vld [vmem:[#allocation10 + $0x58] sm:$0xff]
    %v579 = vld [vmem:[#allocation10 + $0x60] sm:$0xff]
    %v580 = vld [vmem:[#allocation10 + $0x68] sm:$0xff]
    %v581 = vld [vmem:[#allocation10 + $0x70] sm:$0xff]
    %v582 = vld [vmem:[#allocation10 + $0x78] sm:$0xff]
    %v583 = vld [vmem:[#allocation10 + $0x80] sm:$0xff]
    %v584 = vld [vmem:[#allocation10 + $0x88] sm:$0xff]
    %v585 = vld [vmem:[#allocation10 + $0x90] sm:$0xff]
    %v586 = vld [vmem:[#allocation10 + $0x98] sm:$0xff]
    %v587 = vld [vmem:[#allocation10 + $0xa0] sm:$0xff]
    %v588 = vld [vmem:[#allocation10 + $0xa8] sm:$0xff]
    %v589 = vld [vmem:[#allocation10 + $0xb0] sm:$0xff]
    %v590 = vld [vmem:[#allocation10 + $0xb8] sm:$0xff]
    %v591 = vld [vmem:[#allocation10 + $0xc0] sm:$0xff]
    %v592 = vld [vmem:[#allocation10 + $0xc8] sm:$0xff]
    %v593 = vld [vmem:[#allocation10 + $0xd0] sm:$0xff]
    %v594 = vld [vmem:[#allocation10 + $0xd8] sm:$0xff]
    %v595 = vld [vmem:[#allocation10 + $0xe0] sm:$0xff]
    %v596 = vld [vmem:[#allocation10 + $0xe8] sm:$0xff]
    %v597 = vld [vmem:[#allocation10 + $0xf0] sm:$0xff]
    %v598 = vld [vmem:[#allocation10 + $0xf8] sm:$0xff]
    %v631 = vunpack.c.l.b16 %v567
    %v632 = vunpack.c.h.b16 %v567
    %v633 = vunpack.c.l.b16 %v568
    %v634 = vunpack.c.h.b16 %v568
    %v635 = vunpack.c.l.b16 %v569
    %v636 = vunpack.c.h.b16 %v569
    %v637 = vunpack.c.l.b16 %v570
    %v638 = vunpack.c.h.b16 %v570
    %v639 = vunpack.c.l.b16 %v571
    %v640 = vunpack.c.h.b16 %v571
    %v641 = vunpack.c.l.b16 %v572
    %v642 = vunpack.c.h.b16 %v572
    %v643 = vunpack.c.l.b16 %v573
    %v644 = vunpack.c.h.b16 %v573
    %v645 = vunpack.c.l.b16 %v574
    %v646 = vunpack.c.h.b16 %v574
    %v647 = vunpack.c.l.b16 %v575
    %v648 = vunpack.c.h.b16 %v575
    %v649 = vunpack.c.l.b16 %v576
    %v650 = vunpack.c.h.b16 %v576
    %v651 = vunpack.c.l.b16 %v577
    %v652 = vunpack.c.h.b16 %v577
    %v653 = vunpack.c.l.b16 %v578
    %v654 = vunpack.c.h.b16 %v578
    %v655 = vunpack.c.l.b16 %v579
    %v656 = vunpack.c.h.b16 %v579
    %v657 = vunpack.c.l.b16 %v580
    %v658 = vunpack.c.h.b16 %v580
    %v659 = vunpack.c.l.b16 %v581
    %v660 = vunpack.c.h.b16 %v581
    %v661 = vunpack.c.l.b16 %v582
    %v662 = vunpack.c.h.b16 %v582
    %v663 = vunpack.c.l.b16 %v583
    %v664 = vunpack.c.h.b16 %v583
    %v665 = vunpack.c.l.b16 %v584
    %v666 = vunpack.c.h.b16 %v584
    %v667 = vunpack.c.l.b16 %v585
    %v668 = vunpack.c.h.b16 %v585
    %v669 = vunpack.c.l.b16 %v586
    %v670 = vunpack.c.h.b16 %v586
    %v671 = vunpack.c.l.b16 %v587
    %v672 = vunpack.c.h.b16 %v587
    %v673 = vunpack.c.l.b16 %v588
    %v674 = vunpack.c.h.b16 %v588
    %v675 = vunpack.c.l.b16 %v589
    %v676 = vunpack.c.h.b16 %v589
    %v677 = vunpack.c.l.b16 %v590
    %v678 = vunpack.c.h.b16 %v590
    %v679 = vunpack.c.l.b16 %v591
    %v680 = vunpack.c.h.b16 %v591
    %v681 = vunpack.c.l.b16 %v592
    %v682 = vunpack.c.h.b16 %v592
    %v683 = vunpack.c.l.b16 %v593
    %v684 = vunpack.c.h.b16 %v593
    %v685 = vunpack.c.l.b16 %v594
    %v686 = vunpack.c.h.b16 %v594
    %v687 = vunpack.c.l.b16 %v595
    %v688 = vunpack.c.h.b16 %v595
    %v689 = vunpack.c.l.b16 %v596
    %v690 = vunpack.c.h.b16 %v596
    %v691 = vunpack.c.l.b16 %v597
    %v692 = vunpack.c.h.b16 %v597
    %v693 = vunpack.c.l.b16 %v598
    %v694 = vunpack.c.h.b16 %v598
    %v695 = vpack.c.b16 %v633, %v631
    %v696 = vpack.c.b16 %v634, %v632
    %v697 = vpack.c.b16 %v637, %v635
    %v698 = vpack.c.b16 %v638, %v636
    %v699 = vpack.c.b16 %v641, %v639
    %v700 = vpack.c.b16 %v642, %v640
    %v701 = vpack.c.b16 %v645, %v643
    %v702 = vpack.c.b16 %v646, %v644
    %v703 = vpack.c.b16 %v649, %v647
    %v704 = vpack.c.b16 %v650, %v648
    %v705 = vpack.c.b16 %v653, %v651
    %v706 = vpack.c.b16 %v654, %v652
    %v707 = vpack.c.b16 %v657, %v655
    %v708 = vpack.c.b16 %v658, %v656
    %v709 = vpack.c.b16 %v661, %v659
    %v710 = vpack.c.b16 %v662, %v660
    %v711 = vpack.c.b16 %v665, %v663
    %v712 = vpack.c.b16 %v666, %v664
    %v713 = vpack.c.b16 %v669, %v667
    %v714 = vpack.c.b16 %v670, %v668
    %v715 = vpack.c.b16 %v673, %v671
    %v716 = vpack.c.b16 %v674, %v672
    %v717 = vpack.c.b16 %v677, %v675
    %v718 = vpack.c.b16 %v678, %v676
    %v719 = vpack.c.b16 %v681, %v679
    %v720 = vpack.c.b16 %v682, %v680
    %v721 = vpack.c.b16 %v685, %v683
    %v722 = vpack.c.b16 %v686, %v684
    %v723 = vpack.c.b16 %v689, %v687
    %v724 = vpack.c.b16 %v690, %v688
    %v725 = vpack.c.b16 %v693, %v691
    %v726 = vpack.c.b16 %v694, %v692
    %759 = vmatprep.subr.bf16.mxu0 %v710
    %760 = vmatpush1.bf16.msra.mxu0 %v709
    %761 = vmatprep.subr.bf16.mxu0 %v708
    %762 = vmatpush1.bf16.msra.mxu0 %v707
    %763 = vmatprep.subr.bf16.mxu0 %v706
    %764 = vmatpush1.bf16.msra.mxu0 %v705
    %765 = vmatprep.subr.bf16.mxu0 %v704
    %766 = vmatpush1.bf16.msra.mxu0 %v703
    %767 = vmatprep.subr.bf16.mxu0 %v702
    %768 = vmatpush1.bf16.msra.mxu0 %v701
    %769 = vmatprep.subr.bf16.mxu0 %v700
    %770 = vmatpush1.bf16.msra.mxu0 %v699
    %771 = vmatprep.subr.bf16.mxu0 %v698
    %772 = vmatpush1.bf16.msra.mxu0 %v697
    %773 = vmatprep.subr.bf16.mxu0 %v696
    %774 = vmatpush1.bf16.msra.mxu0 %v695
    %775 = vmatprep.subr.bf16.mxu0 %v726
    %776 = vmatpush2.bf16.msra.mxu0 %v725
    %777 = vmatprep.subr.bf16.mxu0 %v724
    %778 = vmatpush2.bf16.msra.mxu0 %v723
    %779 = vmatprep.subr.bf16.mxu0 %v722
    %780 = vmatpush2.bf16.msra.mxu0 %v721
    %781 = vmatprep.subr.bf16.mxu0 %v720
    %782 = vmatpush2.bf16.msra.mxu0 %v719
    %783 = vmatprep.subr.bf16.mxu0 %v718
    %784 = vmatpush2.bf16.msra.mxu0 %v717
    %785 = vmatprep.subr.bf16.mxu0 %v716
    %786 = vmatpush2.bf16.msra.mxu0 %v715
    %787 = vmatprep.subr.bf16.mxu0 %v714
    %788 = vmatpush2.bf16.msra.mxu0 %v713
    %789 = vmatprep.subr.bf16.mxu0 %v712
    %790 = vmatpush2.bf16.msra.mxu0 %v711
    %791 = vmatprep.mubr.bf16.mxu0 %v282
    %792 = vmatmul.mubr.bf16.gmra.mxu0 %v281
    %v793 = vpop.f32.mrf.mxu0
    %v794 = vadd.f32 0.0, %v793
    %v795 = vpop.f32.mrf.mxu0
    %v796 = vadd.f32 0.0, %v795
    %v797 = vpop.f32.mrf.mxu0
    %v798 = vadd.f32 0.0, %v797
    %v799 = vpop.f32.mrf.mxu0
    %v800 = vadd.f32 0.0, %v799
    %801 = vdwg.mxu0
    %v834 = vunpack.c.l.b16 %v535
    %v835 = vunpack.c.h.b16 %v535
    %v836 = vunpack.c.l.b16 %v536
    %v837 = vunpack.c.h.b16 %v536
    %v838 = vunpack.c.l.b16 %v537
    %v839 = vunpack.c.h.b16 %v537
    %v840 = vunpack.c.l.b16 %v538
    %v841 = vunpack.c.h.b16 %v538
    %v842 = vunpack.c.l.b16 %v539
    %v843 = vunpack.c.h.b16 %v539
    %v844 = vunpack.c.l.b16 %v540
    %v845 = vunpack.c.h.b16 %v540
    %v846 = vunpack.c.l.b16 %v541
    %v847 = vunpack.c.h.b16 %v541
    %v848 = vunpack.c.l.b16 %v542
    %v849 = vunpack.c.h.b16 %v542
    %v850 = vunpack.c.l.b16 %v543
    %v851 = vunpack.c.h.b16 %v543
    %v852 = vunpack.c.l.b16 %v544
    %v853 = vunpack.c.h.b16 %v544
    %v854 = vunpack.c.l.b16 %v545
    %v855 = vunpack.c.h.b16 %v545
    %v856 = vunpack.c.l.b16 %v546
    %v857 = vunpack.c.h.b16 %v546
    %v858 = vunpack.c.l.b16 %v547
    %v859 = vunpack.c.h.b16 %v547
    %v860 = vunpack.c.l.b16 %v548
    %v861 = vunpack.c.h.b16 %v548
    %v862 = vunpack.c.l.b16 %v549
    %v863 = vunpack.c.h.b16 %v549
    %v864 = vunpack.c.l.b16 %v550
    %v865 = vunpack.c.h.b16 %v550
    %v866 = vunpack.c.l.b16 %v551
    %v867 = vunpack.c.h.b16 %v551
    %v868 = vunpack.c.l.b16 %v552
    %v869 = vunpack.c.h.b16 %v552
    %v870 = vunpack.c.l.b16 %v553
    %v871 = vunpack.c.h.b16 %v553
    %v872 = vunpack.c.l.b16 %v554
    %v873 = vunpack.c.h.b16 %v554
    %v874 = vunpack.c.l.b16 %v555
    %v875 = vunpack.c.h.b16 %v555
    %v876 = vunpack.c.l.b16 %v556
    %v877 = vunpack.c.h.b16 %v556
    %v878 = vunpack.c.l.b16 %v557
    %v879 = vunpack.c.h.b16 %v557
    %v880 = vunpack.c.l.b16 %v558
    %v881 = vunpack.c.h.b16 %v558
    %v882 = vunpack.c.l.b16 %v559
    %v883 = vunpack.c.h.b16 %v559
    %v884 = vunpack.c.l.b16 %v560
    %v885 = vunpack.c.h.b16 %v560
    %v886 = vunpack.c.l.b16 %v561
    %v887 = vunpack.c.h.b16 %v561
    %v888 = vunpack.c.l.b16 %v562
    %v889 = vunpack.c.h.b16 %v562
    %v890 = vunpack.c.l.b16 %v563
    %v891 = vunpack.c.h.b16 %v563
    %v892 = vunpack.c.l.b16 %v564
    %v893 = vunpack.c.h.b16 %v564
    %v894 = vunpack.c.l.b16 %v565
    %v895 = vunpack.c.h.b16 %v565
    %v896 = vunpack.c.l.b16 %v566
    %v897 = vunpack.c.h.b16 %v566
    %v898 = vpack.c.b16 %v836, %v834
    %v899 = vpack.c.b16 %v837, %v835
    %v900 = vpack.c.b16 %v840, %v838
    %v901 = vpack.c.b16 %v841, %v839
    %v902 = vpack.c.b16 %v844, %v842
    %v903 = vpack.c.b16 %v845, %v843
    %v904 = vpack.c.b16 %v848, %v846
    %v905 = vpack.c.b16 %v849, %v847
    %v906 = vpack.c.b16 %v852, %v850
    %v907 = vpack.c.b16 %v853, %v851
    %v908 = vpack.c.b16 %v856, %v854
    %v909 = vpack.c.b16 %v857, %v855
    %v910 = vpack.c.b16 %v860, %v858
    %v911 = vpack.c.b16 %v861, %v859
    %v912 = vpack.c.b16 %v864, %v862
    %v913 = vpack.c.b16 %v865, %v863
    %v914 = vpack.c.b16 %v868, %v866
    %v915 = vpack.c.b16 %v869, %v867
    %v916 = vpack.c.b16 %v872, %v870
    %v917 = vpack.c.b16 %v873, %v871
    %v918 = vpack.c.b16 %v876, %v874
    %v919 = vpack.c.b16 %v877, %v875
    %v920 = vpack.c.b16 %v880, %v878
    %v921 = vpack.c.b16 %v881, %v879
    %v922 = vpack.c.b16 %v884, %v882
    %v923 = vpack.c.b16 %v885, %v883
    %v924 = vpack.c.b16 %v888, %v886
    %v925 = vpack.c.b16 %v889, %v887
    %v926 = vpack.c.b16 %v892, %v890
    %v927 = vpack.c.b16 %v893, %v891
    %v928 = vpack.c.b16 %v896, %v894
    %v929 = vpack.c.b16 %v897, %v895
    %962 = vmatprep.subr.bf16.mxu0 %v913
    %963 = vmatpush1.bf16.msra.mxu0 %v912
    %964 = vmatprep.subr.bf16.mxu0 %v911
    %965 = vmatpush1.bf16.msra.mxu0 %v910
    %966 = vmatprep.subr.bf16.mxu0 %v909
    %967 = vmatpush1.bf16.msra.mxu0 %v908
    %968 = vmatprep.subr.bf16.mxu0 %v907
    %969 = vmatpush1.bf16.msra.mxu0 %v906
    %970 = vmatprep.subr.bf16.mxu0 %v905
    %971 = vmatpush1.bf16.msra.mxu0 %v904
    %972 = vmatprep.subr.bf16.mxu0 %v903
    %973 = vmatpush1.bf16.msra.mxu0 %v902
    %974 = vmatprep.subr.bf16.mxu0 %v901
    %975 = vmatpush1.bf16.msra.mxu0 %v900
    %976 = vmatprep.subr.bf16.mxu0 %v899
    %977 = vmatpush1.bf16.msra.mxu0 %v898
    %978 = vmatprep.subr.bf16.mxu0 %v929
    %979 = vmatpush2.bf16.msra.mxu0 %v928
    %980 = vmatprep.subr.bf16.mxu0 %v927
    %981 = vmatpush2.bf16.msra.mxu0 %v926
    %982 = vmatprep.subr.bf16.mxu0 %v925
    %983 = vmatpush2.bf16.msra.mxu0 %v924
    %984 = vmatprep.subr.bf16.mxu0 %v923
    %985 = vmatpush2.bf16.msra.mxu0 %v922
    %986 = vmatprep.subr.bf16.mxu0 %v921
    %987 = vmatpush2.bf16.msra.mxu0 %v920
    %988 = vmatprep.subr.bf16.mxu0 %v919
    %989 = vmatpush2.bf16.msra.mxu0 %v918
    %990 = vmatprep.subr.bf16.mxu0 %v917
    %991 = vmatpush2.bf16.msra.mxu0 %v916
    %992 = vmatprep.subr.bf16.mxu0 %v915
    %993 = vmatpush2.bf16.msra.mxu0 %v914
    %994 = vmatprep.mubr.bf16.mxu0 %v534
    %995 = vmatmul.mubr.bf16.gmra.mxu0 %v533
    %v996 = vpop.f32.mrf.mxu0
    %v997 = vadd.f32 %v794, %v996
    %v998 = vpop.f32.mrf.mxu0
    %v999 = vadd.f32 %v796, %v998
    %v1000 = vpop.f32.mrf.mxu0
    %v1001 = vadd.f32 %v798, %v1000
    %v1002 = vpop.f32.mrf.mxu0
    %v1003 = vadd.f32 %v800, %v1002
    %1004 = vdwg.mxu0
    %v1006 = vlaneseq
    %v1007 = vshrl.u32 %v1006, 7
    %v1008 = vsub.s32 0, %v1007
    %v1009 = vrot.slane %v180, %v1008
    %v1010 = vlaneseq
    %v1011 = vshrl.u32 %v1010, 7
    %v1012 = vsub.s32 1, %v1011
    %v1013 = vrot.slane %v180, %v1012
    %v1016 = vadd.f32 %v997, %v1009
    %v1017 = vadd.f32 %v999, %v1013
    %v1018 = vadd.f32 %v1001, %v1009
    %v1019 = vadd.f32 %v1003, %v1013
    %v1020 = vmax.f32 %v1016, 0.0
    %v1021 = vmax.f32 %v1017, 0.0
    %v1022 = vmax.f32 %v1018, 0.0
    %v1023 = vmax.f32 %v1019, 0.0
    %v1024 = vpack.c.bf16 %v1022, %v1020
    %v1025 = vpack.c.bf16 %v1023, %v1021
    %v1026 = vld [vmem:[#allocation11] sm:$0xff]
    %v1027 = vld [vmem:[#allocation11 + $0x8] sm:$0xff]
    %v1028 = vld [vmem:[#allocation11 + $0x10] sm:$0xff]
    %v1029 = vld [vmem:[#allocation11 + $0x18] sm:$0xff]
    %v1030 = vld [vmem:[#allocation11 + $0x20] sm:$0xff]
    %v1031 = vld [vmem:[#allocation11 + $0x28] sm:$0xff]
    %v1032 = vld [vmem:[#allocation11 + $0x30] sm:$0xff]
    %v1033 = vld [vmem:[#allocation11 + $0x38] sm:$0xff]
    %v1034 = vld [vmem:[#allocation11 + $0x40] sm:$0xff]
    %v1035 = vld [vmem:[#allocation11 + $0x48] sm:$0xff]
    %v1036 = vld [vmem:[#allocation11 + $0x50] sm:$0xff]
    %v1037 = vld [vmem:[#allocation11 + $0x58] sm:$0xff]
    %v1038 = vld [vmem:[#allocation11 + $0x60] sm:$0xff]
    %v1039 = vld [vmem:[#allocation11 + $0x68] sm:$0xff]
    %v1040 = vld [vmem:[#allocation11 + $0x70] sm:$0xff]
    %v1041 = vld [vmem:[#allocation11 + $0x78] sm:$0xff]
    %v1042 = vld [vmem:[#allocation11 + $0x80] sm:$0xff]
    %v1043 = vld [vmem:[#allocation11 + $0x88] sm:$0xff]
    %v1044 = vld [vmem:[#allocation11 + $0x90] sm:$0xff]
    %v1045 = vld [vmem:[#allocation11 + $0x98] sm:$0xff]
    %v1046 = vld [vmem:[#allocation11 + $0xa0] sm:$0xff]
    %v1047 = vld [vmem:[#allocation11 + $0xa8] sm:$0xff]
    %v1048 = vld [vmem:[#allocation11 + $0xb0] sm:$0xff]
    %v1049 = vld [vmem:[#allocation11 + $0xb8] sm:$0xff]
    %v1050 = vld [vmem:[#allocation11 + $0xc0] sm:$0xff]
    %v1051 = vld [vmem:[#allocation11 + $0xc8] sm:$0xff]
    %v1052 = vld [vmem:[#allocation11 + $0xd0] sm:$0xff]
    %v1053 = vld [vmem:[#allocation11 + $0xd8] sm:$0xff]
    %v1054 = vld [vmem:[#allocation11 + $0xe0] sm:$0xff]
    %v1055 = vld [vmem:[#allocation11 + $0xe8] sm:$0xff]
    %v1056 = vld [vmem:[#allocation11 + $0xf0] sm:$0xff]
    %v1057 = vld [vmem:[#allocation11 + $0xf8] sm:$0xff]
    %v1059 = vlaneseq
    %v1060 = vshrl.u32 %v1059, 7
    %v1061 = vsub.s32 0, %v1060
    %v1062 = vrot.slane %v182, %v1061
    %v1063 = vlaneseq
    %v1064 = vshrl.u32 %v1063, 7
    %v1065 = vsub.s32 1, %v1064
    %v1066 = vrot.slane %v182, %v1065
    %v1101 = vunpack.c.l.b16 %v1026
    %v1102 = vunpack.c.h.b16 %v1026
    %v1103 = vunpack.c.l.b16 %v1027
    %v1104 = vunpack.c.h.b16 %v1027
    %v1105 = vunpack.c.l.b16 %v1028
    %v1106 = vunpack.c.h.b16 %v1028
    %v1107 = vunpack.c.l.b16 %v1029
    %v1108 = vunpack.c.h.b16 %v1029
    %v1109 = vunpack.c.l.b16 %v1030
    %v1110 = vunpack.c.h.b16 %v1030
    %v1111 = vunpack.c.l.b16 %v1031
    %v1112 = vunpack.c.h.b16 %v1031
    %v1113 = vunpack.c.l.b16 %v1032
    %v1114 = vunpack.c.h.b16 %v1032
    %v1115 = vunpack.c.l.b16 %v1033
    %v1116 = vunpack.c.h.b16 %v1033
    %v1117 = vunpack.c.l.b16 %v1034
    %v1118 = vunpack.c.h.b16 %v1034
    %v1119 = vunpack.c.l.b16 %v1035
    %v1120 = vunpack.c.h.b16 %v1035
    %v1121 = vunpack.c.l.b16 %v1036
    %v1122 = vunpack.c.h.b16 %v1036
    %v1123 = vunpack.c.l.b16 %v1037
    %v1124 = vunpack.c.h.b16 %v1037
    %v1125 = vunpack.c.l.b16 %v1038
    %v1126 = vunpack.c.h.b16 %v1038
    %v1127 = vunpack.c.l.b16 %v1039
    %v1128 = vunpack.c.h.b16 %v1039
    %v1129 = vunpack.c.l.b16 %v1040
    %v1130 = vunpack.c.h.b16 %v1040
    %v1131 = vunpack.c.l.b16 %v1041
    %v1132 = vunpack.c.h.b16 %v1041
    %v1133 = vunpack.c.l.b16 %v1042
    %v1134 = vunpack.c.h.b16 %v1042
    %v1135 = vunpack.c.l.b16 %v1043
    %v1136 = vunpack.c.h.b16 %v1043
    %v1137 = vunpack.c.l.b16 %v1044
    %v1138 = vunpack.c.h.b16 %v1044
    %v1139 = vunpack.c.l.b16 %v1045
    %v1140 = vunpack.c.h.b16 %v1045
    %v1141 = vunpack.c.l.b16 %v1046
    %v1142 = vunpack.c.h.b16 %v1046
    %v1143 = vunpack.c.l.b16 %v1047
    %v1144 = vunpack.c.h.b16 %v1047
    %v1145 = vunpack.c.l.b16 %v1048
    %v1146 = vunpack.c.h.b16 %v1048
    %v1147 = vunpack.c.l.b16 %v1049
    %v1148 = vunpack.c.h.b16 %v1049
    %v1149 = vunpack.c.l.b16 %v1050
    %v1150 = vunpack.c.h.b16 %v1050
    %v1151 = vunpack.c.l.b16 %v1051
    %v1152 = vunpack.c.h.b16 %v1051
    %v1153 = vunpack.c.l.b16 %v1052
    %v1154 = vunpack.c.h.b16 %v1052
    %v1155 = vunpack.c.l.b16 %v1053
    %v1156 = vunpack.c.h.b16 %v1053
    %v1157 = vunpack.c.l.b16 %v1054
    %v1158 = vunpack.c.h.b16 %v1054
    %v1159 = vunpack.c.l.b16 %v1055
    %v1160 = vunpack.c.h.b16 %v1055
    %v1161 = vunpack.c.l.b16 %v1056
    %v1162 = vunpack.c.h.b16 %v1056
    %v1163 = vunpack.c.l.b16 %v1057
    %v1164 = vunpack.c.h.b16 %v1057
    %v1165 = vpack.c.b16 %v1103, %v1101
    %v1166 = vpack.c.b16 %v1104, %v1102
    %v1167 = vpack.c.b16 %v1107, %v1105
    %v1168 = vpack.c.b16 %v1108, %v1106
    %v1169 = vpack.c.b16 %v1111, %v1109
    %v1170 = vpack.c.b16 %v1112, %v1110
    %v1171 = vpack.c.b16 %v1115, %v1113
    %v1172 = vpack.c.b16 %v1116, %v1114
    %v1173 = vpack.c.b16 %v1119, %v1117
    %v1174 = vpack.c.b16 %v1120, %v1118
    %v1175 = vpack.c.b16 %v1123, %v1121
    %v1176 = vpack.c.b16 %v1124, %v1122
    %v1177 = vpack.c.b16 %v1127, %v1125
    %v1178 = vpack.c.b16 %v1128, %v1126
    %v1179 = vpack.c.b16 %v1131, %v1129
    %v1180 = vpack.c.b16 %v1132, %v1130
    %v1181 = vpack.c.b16 %v1135, %v1133
    %v1182 = vpack.c.b16 %v1136, %v1134
    %v1183 = vpack.c.b16 %v1139, %v1137
    %v1184 = vpack.c.b16 %v1140, %v1138
    %v1185 = vpack.c.b16 %v1143, %v1141
    %v1186 = vpack.c.b16 %v1144, %v1142
    %v1187 = vpack.c.b16 %v1147, %v1145
    %v1188 = vpack.c.b16 %v1148, %v1146
    %v1189 = vpack.c.b16 %v1151, %v1149
    %v1190 = vpack.c.b16 %v1152, %v1150
    %v1191 = vpack.c.b16 %v1155, %v1153
    %v1192 = vpack.c.b16 %v1156, %v1154
    %v1193 = vpack.c.b16 %v1159, %v1157
    %v1194 = vpack.c.b16 %v1160, %v1158
    %v1195 = vpack.c.b16 %v1163, %v1161
    %v1196 = vpack.c.b16 %v1164, %v1162
    %1229 = vmatprep.subr.bf16.mxu0 %v1180
    %1230 = vmatpush1.bf16.msra.mxu0 %v1179
    %1231 = vmatprep.subr.bf16.mxu0 %v1178
    %1232 = vmatpush1.bf16.msra.mxu0 %v1177
    %1233 = vmatprep.subr.bf16.mxu0 %v1176
    %1234 = vmatpush1.bf16.msra.mxu0 %v1175
    %1235 = vmatprep.subr.bf16.mxu0 %v1174
    %1236 = vmatpush1.bf16.msra.mxu0 %v1173
    %1237 = vmatprep.subr.bf16.mxu0 %v1172
    %1238 = vmatpush1.bf16.msra.mxu0 %v1171
    %1239 = vmatprep.subr.bf16.mxu0 %v1170
    %1240 = vmatpush1.bf16.msra.mxu0 %v1169
    %1241 = vmatprep.subr.bf16.mxu0 %v1168
    %1242 = vmatpush1.bf16.msra.mxu0 %v1167
    %1243 = vmatprep.subr.bf16.mxu0 %v1166
    %1244 = vmatpush1.bf16.msra.mxu0 %v1165
    %1245 = vmatprep.subr.bf16.mxu0 %v1196
    %1246 = vmatpush2.bf16.msra.mxu0 %v1195
    %1247 = vmatprep.subr.bf16.mxu0 %v1194
    %1248 = vmatpush2.bf16.msra.mxu0 %v1193
    %1249 = vmatprep.subr.bf16.mxu0 %v1192
    %1250 = vmatpush2.bf16.msra.mxu0 %v1191
    %1251 = vmatprep.subr.bf16.mxu0 %v1190
    %1252 = vmatpush2.bf16.msra.mxu0 %v1189
    %1253 = vmatprep.subr.bf16.mxu0 %v1188
    %1254 = vmatpush2.bf16.msra.mxu0 %v1187
    %1255 = vmatprep.subr.bf16.mxu0 %v1186
    %1256 = vmatpush2.bf16.msra.mxu0 %v1185
    %1257 = vmatprep.subr.bf16.mxu0 %v1184
    %1258 = vmatpush2.bf16.msra.mxu0 %v1183
    %1259 = vmatprep.subr.bf16.mxu0 %v1182
    %1260 = vmatpush2.bf16.msra.mxu0 %v1181
    %1261 = vmatprep.mubr.bf16.mxu0 %v1025
    %1262 = vmatmul.mubr.bf16.gmra.mxu0 %v1024
    %v1263 = vpop.f32.mrf.mxu0
    %v1264 = vadd.f32 %v1062, %v1263
    %v1265 = vpop.f32.mrf.mxu0
    %v1266 = vadd.f32 %v1066, %v1265
    %v1267 = vpop.f32.mrf.mxu0
    %v1268 = vadd.f32 %v1062, %v1267
    %v1269 = vpop.f32.mrf.mxu0
    %v1270 = vadd.f32 %v1066, %v1269
    %1271 = vdwg.mxu0
    %v1272 = vmax.f32 %v1264, 0.0
    %v1273 = vmax.f32 %v1266, 0.0
    %v1274 = vmax.f32 %v1268, 0.0
    %v1275 = vmax.f32 %v1270, 0.0
    %v1276 = vpack.c.bf16 %v1274, %v1272
    %v1277 = vpack.c.bf16 %v1275, %v1273
    %v1278 = vld [vmem:[#allocation13] sm:$0xff]
    %v1279 = vld [vmem:[#allocation13 + $0x8] sm:$0xff]
    %v1280 = vld [vmem:[#allocation13 + $0x10] sm:$0xff]
    %v1281 = vld [vmem:[#allocation13 + $0x18] sm:$0xff]
    %v1282 = vld [vmem:[#allocation13 + $0x20] sm:$0xff]
    %v1283 = vld [vmem:[#allocation13 + $0x28] sm:$0xff]
    %v1284 = vld [vmem:[#allocation13 + $0x30] sm:$0xff]
    %v1285 = vld [vmem:[#allocation13 + $0x38] sm:$0xff]
    %v1286 = vld [vmem:[#allocation13 + $0x40] sm:$0xff]
    %v1287 = vld [vmem:[#allocation13 + $0x48] sm:$0xff]
    %v1288 = vld [vmem:[#allocation13 + $0x50] sm:$0xff]
    %v1289 = vld [vmem:[#allocation13 + $0x58] sm:$0xff]
    %v1290 = vld [vmem:[#allocation13 + $0x60] sm:$0xff]
    %v1291 = vld [vmem:[#allocation13 + $0x68] sm:$0xff]
    %v1292 = vld [vmem:[#allocation13 + $0x70] sm:$0xff]
    %v1293 = vld [vmem:[#allocation13 + $0x78] sm:$0xff]
    %v1294 = vld [vmem:[#allocation13 + $0x80] sm:$0xff]
    %v1295 = vld [vmem:[#allocation13 + $0x88] sm:$0xff]
    %v1296 = vld [vmem:[#allocation13 + $0x90] sm:$0xff]
    %v1297 = vld [vmem:[#allocation13 + $0x98] sm:$0xff]
    %v1298 = vld [vmem:[#allocation13 + $0xa0] sm:$0xff]
    %v1299 = vld [vmem:[#allocation13 + $0xa8] sm:$0xff]
    %v1300 = vld [vmem:[#allocation13 + $0xb0] sm:$0xff]
    %v1301 = vld [vmem:[#allocation13 + $0xb8] sm:$0xff]
    %v1302 = vld [vmem:[#allocation13 + $0xc0] sm:$0xff]
    %v1303 = vld [vmem:[#allocation13 + $0xc8] sm:$0xff]
    %v1304 = vld [vmem:[#allocation13 + $0xd0] sm:$0xff]
    %v1305 = vld [vmem:[#allocation13 + $0xd8] sm:$0xff]
    %v1306 = vld [vmem:[#allocation13 + $0xe0] sm:$0xff]
    %v1307 = vld [vmem:[#allocation13 + $0xe8] sm:$0xff]
    %v1308 = vld [vmem:[#allocation13 + $0xf0] sm:$0xff]
    %v1309 = vld [vmem:[#allocation13 + $0xf8] sm:$0xff]
    %v1310 = vld [vmem:[#allocation14] sm:$0xff]
    %v1311 = vld [vmem:[#allocation14 + $0x8] sm:$0xff]
    %v1312 = vld [vmem:[#allocation14 + $0x10] sm:$0xff]
    %v1313 = vld [vmem:[#allocation14 + $0x18] sm:$0xff]
    %v1314 = vld [vmem:[#allocation14 + $0x20] sm:$0xff]
    %v1315 = vld [vmem:[#allocation14 + $0x28] sm:$0xff]
    %v1316 = vld [vmem:[#allocation14 + $0x30] sm:$0xff]
    %v1317 = vld [vmem:[#allocation14 + $0x38] sm:$0xff]
    %v1318 = vld [vmem:[#allocation14 + $0x40] sm:$0xff]
    %v1319 = vld [vmem:[#allocation14 + $0x48] sm:$0xff]
    %v1320 = vld [vmem:[#allocation14 + $0x50] sm:$0xff]
    %v1321 = vld [vmem:[#allocation14 + $0x58] sm:$0xff]
    %v1322 = vld [vmem:[#allocation14 + $0x60] sm:$0xff]
    %v1323 = vld [vmem:[#allocation14 + $0x68] sm:$0xff]
    %v1324 = vld [vmem:[#allocation14 + $0x70] sm:$0xff]
    %v1325 = vld [vmem:[#allocation14 + $0x78] sm:$0xff]
    %v1326 = vld [vmem:[#allocation14 + $0x80] sm:$0xff]
    %v1327 = vld [vmem:[#allocation14 + $0x88] sm:$0xff]
    %v1328 = vld [vmem:[#allocation14 + $0x90] sm:$0xff]
    %v1329 = vld [vmem:[#allocation14 + $0x98] sm:$0xff]
    %v1330 = vld [vmem:[#allocation14 + $0xa0] sm:$0xff]
    %v1331 = vld [vmem:[#allocation14 + $0xa8] sm:$0xff]
    %v1332 = vld [vmem:[#allocation14 + $0xb0] sm:$0xff]
    %v1333 = vld [vmem:[#allocation14 + $0xb8] sm:$0xff]
    %v1334 = vld [vmem:[#allocation14 + $0xc0] sm:$0xff]
    %v1335 = vld [vmem:[#allocation14 + $0xc8] sm:$0xff]
    %v1336 = vld [vmem:[#allocation14 + $0xd0] sm:$0xff]
    %v1337 = vld [vmem:[#allocation14 + $0xd8] sm:$0xff]
    %v1338 = vld [vmem:[#allocation14 + $0xe0] sm:$0xff]
    %v1339 = vld [vmem:[#allocation14 + $0xe8] sm:$0xff]
    %v1340 = vld [vmem:[#allocation14 + $0xf0] sm:$0xff]
    %v1341 = vld [vmem:[#allocation14 + $0xf8] sm:$0xff]
    %v1374 = vunpack.c.l.b16 %v1310
    %v1375 = vunpack.c.h.b16 %v1310
    %v1376 = vunpack.c.l.b16 %v1311
    %v1377 = vunpack.c.h.b16 %v1311
    %v1378 = vunpack.c.l.b16 %v1312
    %v1379 = vunpack.c.h.b16 %v1312
    %v1380 = vunpack.c.l.b16 %v1313
    %v1381 = vunpack.c.h.b16 %v1313
    %v1382 = vunpack.c.l.b16 %v1314
    %v1383 = vunpack.c.h.b16 %v1314
    %v1384 = vunpack.c.l.b16 %v1315
    %v1385 = vunpack.c.h.b16 %v1315
    %v1386 = vunpack.c.l.b16 %v1316
    %v1387 = vunpack.c.h.b16 %v1316
    %v1388 = vunpack.c.l.b16 %v1317
    %v1389 = vunpack.c.h.b16 %v1317
    %v1390 = vunpack.c.l.b16 %v1318
    %v1391 = vunpack.c.h.b16 %v1318
    %v1392 = vunpack.c.l.b16 %v1319
    %v1393 = vunpack.c.h.b16 %v1319
    %v1394 = vunpack.c.l.b16 %v1320
    %v1395 = vunpack.c.h.b16 %v1320
    %v1396 = vunpack.c.l.b16 %v1321
    %v1397 = vunpack.c.h.b16 %v1321
    %v1398 = vunpack.c.l.b16 %v1322
    %v1399 = vunpack.c.h.b16 %v1322
    %v1400 = vunpack.c.l.b16 %v1323
    %v1401 = vunpack.c.h.b16 %v1323
    %v1402 = vunpack.c.l.b16 %v1324
    %v1403 = vunpack.c.h.b16 %v1324
    %v1404 = vunpack.c.l.b16 %v1325
    %v1405 = vunpack.c.h.b16 %v1325
    %v1406 = vunpack.c.l.b16 %v1326
    %v1407 = vunpack.c.h.b16 %v1326
    %v1408 = vunpack.c.l.b16 %v1327
    %v1409 = vunpack.c.h.b16 %v1327
    %v1410 = vunpack.c.l.b16 %v1328
    %v1411 = vunpack.c.h.b16 %v1328
    %v1412 = vunpack.c.l.b16 %v1329
    %v1413 = vunpack.c.h.b16 %v1329
    %v1414 = vunpack.c.l.b16 %v1330
    %v1415 = vunpack.c.h.b16 %v1330
    %v1416 = vunpack.c.l.b16 %v1331
    %v1417 = vunpack.c.h.b16 %v1331
    %v1418 = vunpack.c.l.b16 %v1332
    %v1419 = vunpack.c.h.b16 %v1332
    %v1420 = vunpack.c.l.b16 %v1333
    %v1421 = vunpack.c.h.b16 %v1333
    %v1422 = vunpack.c.l.b16 %v1334
    %v1423 = vunpack.c.h.b16 %v1334
    %v1424 = vunpack.c.l.b16 %v1335
    %v1425 = vunpack.c.h.b16 %v1335
    %v1426 = vunpack.c.l.b16 %v1336
    %v1427 = vunpack.c.h.b16 %v1336
    %v1428 = vunpack.c.l.b16 %v1337
    %v1429 = vunpack.c.h.b16 %v1337
    %v1430 = vunpack.c.l.b16 %v1338
    %v1431 = vunpack.c.h.b16 %v1338
    %v1432 = vunpack.c.l.b16 %v1339
    %v1433 = vunpack.c.h.b16 %v1339
    %v1434 = vunpack.c.l.b16 %v1340
    %v1435 = vunpack.c.h.b16 %v1340
    %v1436 = vunpack.c.l.b16 %v1341
    %v1437 = vunpack.c.h.b16 %v1341
    %v1438 = vpack.c.b16 %v1376, %v1374
    %v1439 = vpack.c.b16 %v1377, %v1375
    %v1440 = vpack.c.b16 %v1380, %v1378
    %v1441 = vpack.c.b16 %v1381, %v1379
    %v1442 = vpack.c.b16 %v1384, %v1382
    %v1443 = vpack.c.b16 %v1385, %v1383
    %v1444 = vpack.c.b16 %v1388, %v1386
    %v1445 = vpack.c.b16 %v1389, %v1387
    %v1446 = vpack.c.b16 %v1392, %v1390
    %v1447 = vpack.c.b16 %v1393, %v1391
    %v1448 = vpack.c.b16 %v1396, %v1394
    %v1449 = vpack.c.b16 %v1397, %v1395
    %v1450 = vpack.c.b16 %v1400, %v1398
    %v1451 = vpack.c.b16 %v1401, %v1399
    %v1452 = vpack.c.b16 %v1404, %v1402
    %v1453 = vpack.c.b16 %v1405, %v1403
    %v1454 = vpack.c.b16 %v1408, %v1406
    %v1455 = vpack.c.b16 %v1409, %v1407
    %v1456 = vpack.c.b16 %v1412, %v1410
    %v1457 = vpack.c.b16 %v1413, %v1411
    %v1458 = vpack.c.b16 %v1416, %v1414
    %v1459 = vpack.c.b16 %v1417, %v1415
    %v1460 = vpack.c.b16 %v1420, %v1418
    %v1461 = vpack.c.b16 %v1421, %v1419
    %v1462 = vpack.c.b16 %v1424, %v1422
    %v1463 = vpack.c.b16 %v1425, %v1423
    %v1464 = vpack.c.b16 %v1428, %v1426
    %v1465 = vpack.c.b16 %v1429, %v1427
    %v1466 = vpack.c.b16 %v1432, %v1430
    %v1467 = vpack.c.b16 %v1433, %v1431
    %v1468 = vpack.c.b16 %v1436, %v1434
    %v1469 = vpack.c.b16 %v1437, %v1435
    %1502 = vmatprep.subr.bf16.mxu0 %v1453
    %1503 = vmatpush1.bf16.msra.mxu0 %v1452
    %1504 = vmatprep.subr.bf16.mxu0 %v1451
    %1505 = vmatpush1.bf16.msra.mxu0 %v1450
    %1506 = vmatprep.subr.bf16.mxu0 %v1449
    %1507 = vmatpush1.bf16.msra.mxu0 %v1448
    %1508 = vmatprep.subr.bf16.mxu0 %v1447
    %1509 = vmatpush1.bf16.msra.mxu0 %v1446
    %1510 = vmatprep.subr.bf16.mxu0 %v1445
    %1511 = vmatpush1.bf16.msra.mxu0 %v1444
    %1512 = vmatprep.subr.bf16.mxu0 %v1443
    %1513 = vmatpush1.bf16.msra.mxu0 %v1442
    %1514 = vmatprep.subr.bf16.mxu0 %v1441
    %1515 = vmatpush1.bf16.msra.mxu0 %v1440
    %1516 = vmatprep.subr.bf16.mxu0 %v1439
    %1517 = vmatpush1.bf16.msra.mxu0 %v1438
    %1518 = vmatprep.subr.bf16.mxu0 %v1469
    %1519 = vmatpush2.bf16.msra.mxu0 %v1468
    %1520 = vmatprep.subr.bf16.mxu0 %v1467
    %1521 = vmatpush2.bf16.msra.mxu0 %v1466
    %1522 = vmatprep.subr.bf16.mxu0 %v1465
    %1523 = vmatpush2.bf16.msra.mxu0 %v1464
    %1524 = vmatprep.subr.bf16.mxu0 %v1463
    %1525 = vmatpush2.bf16.msra.mxu0 %v1462
    %1526 = vmatprep.subr.bf16.mxu0 %v1461
    %1527 = vmatpush2.bf16.msra.mxu0 %v1460
    %1528 = vmatprep.subr.bf16.mxu0 %v1459
    %1529 = vmatpush2.bf16.msra.mxu0 %v1458
    %1530 = vmatprep.subr.bf16.mxu0 %v1457
    %1531 = vmatpush2.bf16.msra.mxu0 %v1456
    %1532 = vmatprep.subr.bf16.mxu0 %v1455
    %1533 = vmatpush2.bf16.msra.mxu0 %v1454
    %1534 = vmatprep.mubr.bf16.mxu0 %v1025
    %1535 = vmatmul.mubr.bf16.gmra.mxu0 %v1024
    %v1536 = vpop.f32.mrf.mxu0
    %v1537 = vadd.f32 0.0, %v1536
    %v1538 = vpop.f32.mrf.mxu0
    %v1539 = vadd.f32 0.0, %v1538
    %v1540 = vpop.f32.mrf.mxu0
    %v1541 = vadd.f32 0.0, %v1540
    %v1542 = vpop.f32.mrf.mxu0
    %v1543 = vadd.f32 0.0, %v1542
    %1544 = vdwg.mxu0
    %v1577 = vunpack.c.l.b16 %v1278
    %v1578 = vunpack.c.h.b16 %v1278
    %v1579 = vunpack.c.l.b16 %v1279
    %v1580 = vunpack.c.h.b16 %v1279
    %v1581 = vunpack.c.l.b16 %v1280
    %v1582 = vunpack.c.h.b16 %v1280
    %v1583 = vunpack.c.l.b16 %v1281
    %v1584 = vunpack.c.h.b16 %v1281
    %v1585 = vunpack.c.l.b16 %v1282
    %v1586 = vunpack.c.h.b16 %v1282
    %v1587 = vunpack.c.l.b16 %v1283
    %v1588 = vunpack.c.h.b16 %v1283
    %v1589 = vunpack.c.l.b16 %v1284
    %v1590 = vunpack.c.h.b16 %v1284
    %v1591 = vunpack.c.l.b16 %v1285
    %v1592 = vunpack.c.h.b16 %v1285
    %v1593 = vunpack.c.l.b16 %v1286
    %v1594 = vunpack.c.h.b16 %v1286
    %v1595 = vunpack.c.l.b16 %v1287
    %v1596 = vunpack.c.h.b16 %v1287
    %v1597 = vunpack.c.l.b16 %v1288
    %v1598 = vunpack.c.h.b16 %v1288
    %v1599 = vunpack.c.l.b16 %v1289
    %v1600 = vunpack.c.h.b16 %v1289
    %v1601 = vunpack.c.l.b16 %v1290
    %v1602 = vunpack.c.h.b16 %v1290
    %v1603 = vunpack.c.l.b16 %v1291
    %v1604 = vunpack.c.h.b16 %v1291
    %v1605 = vunpack.c.l.b16 %v1292
    %v1606 = vunpack.c.h.b16 %v1292
    %v1607 = vunpack.c.l.b16 %v1293
    %v1608 = vunpack.c.h.b16 %v1293
    %v1609 = vunpack.c.l.b16 %v1294
    %v1610 = vunpack.c.h.b16 %v1294
    %v1611 = vunpack.c.l.b16 %v1295
    %v1612 = vunpack.c.h.b16 %v1295
    %v1613 = vunpack.c.l.b16 %v1296
    %v1614 = vunpack.c.h.b16 %v1296
    %v1615 = vunpack.c.l.b16 %v1297
    %v1616 = vunpack.c.h.b16 %v1297
    %v1617 = vunpack.c.l.b16 %v1298
    %v1618 = vunpack.c.h.b16 %v1298
    %v1619 = vunpack.c.l.b16 %v1299
    %v1620 = vunpack.c.h.b16 %v1299
    %v1621 = vunpack.c.l.b16 %v1300
    %v1622 = vunpack.c.h.b16 %v1300
    %v1623 = vunpack.c.l.b16 %v1301
    %v1624 = vunpack.c.h.b16 %v1301
    %v1625 = vunpack.c.l.b16 %v1302
    %v1626 = vunpack.c.h.b16 %v1302
    %v1627 = vunpack.c.l.b16 %v1303
    %v1628 = vunpack.c.h.b16 %v1303
    %v1629 = vunpack.c.l.b16 %v1304
    %v1630 = vunpack.c.h.b16 %v1304
    %v1631 = vunpack.c.l.b16 %v1305
    %v1632 = vunpack.c.h.b16 %v1305
    %v1633 = vunpack.c.l.b16 %v1306
    %v1634 = vunpack.c.h.b16 %v1306
    %v1635 = vunpack.c.l.b16 %v1307
    %v1636 = vunpack.c.h.b16 %v1307
    %v1637 = vunpack.c.l.b16 %v1308
    %v1638 = vunpack.c.h.b16 %v1308
    %v1639 = vunpack.c.l.b16 %v1309
    %v1640 = vunpack.c.h.b16 %v1309
    %v1641 = vpack.c.b16 %v1579, %v1577
    %v1642 = vpack.c.b16 %v1580, %v1578
    %v1643 = vpack.c.b16 %v1583, %v1581
    %v1644 = vpack.c.b16 %v1584, %v1582
    %v1645 = vpack.c.b16 %v1587, %v1585
    %v1646 = vpack.c.b16 %v1588, %v1586
    %v1647 = vpack.c.b16 %v1591, %v1589
    %v1648 = vpack.c.b16 %v1592, %v1590
    %v1649 = vpack.c.b16 %v1595, %v1593
    %v1650 = vpack.c.b16 %v1596, %v1594
    %v1651 = vpack.c.b16 %v1599, %v1597
    %v1652 = vpack.c.b16 %v1600, %v1598
    %v1653 = vpack.c.b16 %v1603, %v1601
    %v1654 = vpack.c.b16 %v1604, %v1602
    %v1655 = vpack.c.b16 %v1607, %v1605
    %v1656 = vpack.c.b16 %v1608, %v1606
    %v1657 = vpack.c.b16 %v1611, %v1609
    %v1658 = vpack.c.b16 %v1612, %v1610
    %v1659 = vpack.c.b16 %v1615, %v1613
    %v1660 = vpack.c.b16 %v1616, %v1614
    %v1661 = vpack.c.b16 %v1619, %v1617
    %v1662 = vpack.c.b16 %v1620, %v1618
    %v1663 = vpack.c.b16 %v1623, %v1621
    %v1664 = vpack.c.b16 %v1624, %v1622
    %v1665 = vpack.c.b16 %v1627, %v1625
    %v1666 = vpack.c.b16 %v1628, %v1626
    %v1667 = vpack.c.b16 %v1631, %v1629
    %v1668 = vpack.c.b16 %v1632, %v1630
    %v1669 = vpack.c.b16 %v1635, %v1633
    %v1670 = vpack.c.b16 %v1636, %v1634
    %v1671 = vpack.c.b16 %v1639, %v1637
    %v1672 = vpack.c.b16 %v1640, %v1638
    %1705 = vmatprep.subr.bf16.mxu0 %v1656
    %1706 = vmatpush1.bf16.msra.mxu0 %v1655
    %1707 = vmatprep.subr.bf16.mxu0 %v1654
    %1708 = vmatpush1.bf16.msra.mxu0 %v1653
    %1709 = vmatprep.subr.bf16.mxu0 %v1652
    %1710 = vmatpush1.bf16.msra.mxu0 %v1651
    %1711 = vmatprep.subr.bf16.mxu0 %v1650
    %1712 = vmatpush1.bf16.msra.mxu0 %v1649
    %1713 = vmatprep.subr.bf16.mxu0 %v1648
    %1714 = vmatpush1.bf16.msra.mxu0 %v1647
    %1715 = vmatprep.subr.bf16.mxu0 %v1646
    %1716 = vmatpush1.bf16.msra.mxu0 %v1645
    %1717 = vmatprep.subr.bf16.mxu0 %v1644
    %1718 = vmatpush1.bf16.msra.mxu0 %v1643
    %1719 = vmatprep.subr.bf16.mxu0 %v1642
    %1720 = vmatpush1.bf16.msra.mxu0 %v1641
    %1721 = vmatprep.subr.bf16.mxu0 %v1672
    %1722 = vmatpush2.bf16.msra.mxu0 %v1671
    %1723 = vmatprep.subr.bf16.mxu0 %v1670
    %1724 = vmatpush2.bf16.msra.mxu0 %v1669
    %1725 = vmatprep.subr.bf16.mxu0 %v1668
    %1726 = vmatpush2.bf16.msra.mxu0 %v1667
    %1727 = vmatprep.subr.bf16.mxu0 %v1666
    %1728 = vmatpush2.bf16.msra.mxu0 %v1665
    %1729 = vmatprep.subr.bf16.mxu0 %v1664
    %1730 = vmatpush2.bf16.msra.mxu0 %v1663
    %1731 = vmatprep.subr.bf16.mxu0 %v1662
    %1732 = vmatpush2.bf16.msra.mxu0 %v1661
    %1733 = vmatprep.subr.bf16.mxu0 %v1660
    %1734 = vmatpush2.bf16.msra.mxu0 %v1659
    %1735 = vmatprep.subr.bf16.mxu0 %v1658
    %1736 = vmatpush2.bf16.msra.mxu0 %v1657
    %1737 = vmatprep.mubr.bf16.mxu0 %v1277
    %1738 = vmatmul.mubr.bf16.gmra.mxu0 %v1276
    %v1739 = vpop.f32.mrf.mxu0
    %v1740 = vadd.f32 %v1537, %v1739
    %v1741 = vpop.f32.mrf.mxu0
    %v1742 = vadd.f32 %v1539, %v1741
    %v1743 = vpop.f32.mrf.mxu0
    %v1744 = vadd.f32 %v1541, %v1743
    %v1745 = vpop.f32.mrf.mxu0
    %v1746 = vadd.f32 %v1543, %v1745
    %1747 = vdwg.mxu0
    %v1749 = vlaneseq
    %v1750 = vshrl.u32 %v1749, 7
    %v1751 = vsub.s32 0, %v1750
    %v1752 = vrot.slane %v184, %v1751
    %v1753 = vlaneseq
    %v1754 = vshrl.u32 %v1753, 7
    %v1755 = vsub.s32 1, %v1754
    %v1756 = vrot.slane %v184, %v1755
    %v1759 = vadd.f32 %v1740, %v1752
    %v1760 = vadd.f32 %v1742, %v1756
    %v1761 = vadd.f32 %v1744, %v1752
    %v1762 = vadd.f32 %v1746, %v1756
    %v1763 = vmax.f32 %v1759, 0.0
    %v1764 = vmax.f32 %v1760, 0.0
    %v1765 = vmax.f32 %v1761, 0.0
    %v1766 = vmax.f32 %v1762, 0.0
    %v1767 = vpack.c.bf16 %v1765, %v1763
    %v1768 = vpack.c.bf16 %v1766, %v1764
    %v1769 = vld [vmem:[#allocation16] sm:$0xf]
    %v1770 = vld [vmem:[#allocation16 + $0x4] sm:$0xf]
    %v1771 = vld [vmem:[#allocation16 + $0x8] sm:$0xf]
    %v1772 = vld [vmem:[#allocation16 + $0xc] sm:$0xf]
    %v1773 = vld [vmem:[#allocation16 + $0x10] sm:$0xf]
    %v1774 = vld [vmem:[#allocation16 + $0x14] sm:$0xf]
    %v1775 = vld [vmem:[#allocation16 + $0x18] sm:$0xf]
    %v1776 = vld [vmem:[#allocation16 + $0x1c] sm:$0xf]
    %v1777 = vld [vmem:[#allocation16 + $0x20] sm:$0xf]
    %v1778 = vld [vmem:[#allocation16 + $0x24] sm:$0xf]
    %v1779 = vld [vmem:[#allocation16 + $0x28] sm:$0xf]
    %v1780 = vld [vmem:[#allocation16 + $0x2c] sm:$0xf]
    %v1781 = vld [vmem:[#allocation16 + $0x30] sm:$0xf]
    %v1782 = vld [vmem:[#allocation16 + $0x34] sm:$0xf]
    %v1783 = vld [vmem:[#allocation16 + $0x38] sm:$0xf]
    %v1784 = vld [vmem:[#allocation16 + $0x3c] sm:$0xf]
    %v1785 = vld [vmem:[#allocation16 + $0x40] sm:$0xf]
    %v1786 = vld [vmem:[#allocation16 + $0x44] sm:$0xf]
    %v1787 = vld [vmem:[#allocation16 + $0x48] sm:$0xf]
    %v1788 = vld [vmem:[#allocation16 + $0x4c] sm:$0xf]
    %v1789 = vld [vmem:[#allocation16 + $0x50] sm:$0xf]
    %v1790 = vld [vmem:[#allocation16 + $0x54] sm:$0xf]
    %v1791 = vld [vmem:[#allocation16 + $0x58] sm:$0xf]
    %v1792 = vld [vmem:[#allocation16 + $0x5c] sm:$0xf]
    %v1793 = vld [vmem:[#allocation16 + $0x60] sm:$0xf]
    %v1794 = vld [vmem:[#allocation16 + $0x64] sm:$0xf]
    %v1795 = vld [vmem:[#allocation16 + $0x68] sm:$0xf]
    %v1796 = vld [vmem:[#allocation16 + $0x6c] sm:$0xf]
    %v1797 = vld [vmem:[#allocation16 + $0x70] sm:$0xf]
    %v1798 = vld [vmem:[#allocation16 + $0x74] sm:$0xf]
    %v1799 = vld [vmem:[#allocation16 + $0x78] sm:$0xf]
    %v1800 = vld [vmem:[#allocation16 + $0x7c] sm:$0xf]
    %v1833 = vunpack.c.l.b16 %v1769
    %v1834 = vunpack.c.l.b16 %v1770
    %v1835 = vunpack.c.l.b16 %v1771
    %v1836 = vunpack.c.l.b16 %v1772
    %v1837 = vunpack.c.l.b16 %v1773
    %v1838 = vunpack.c.l.b16 %v1774
    %v1839 = vunpack.c.l.b16 %v1775
    %v1840 = vunpack.c.l.b16 %v1776
    %v1841 = vunpack.c.l.b16 %v1777
    %v1842 = vunpack.c.l.b16 %v1778
    %v1843 = vunpack.c.l.b16 %v1779
    %v1844 = vunpack.c.l.b16 %v1780
    %v1845 = vunpack.c.l.b16 %v1781
    %v1846 = vunpack.c.l.b16 %v1782
    %v1847 = vunpack.c.l.b16 %v1783
    %v1848 = vunpack.c.l.b16 %v1784
    %v1849 = vunpack.c.l.b16 %v1785
    %v1850 = vunpack.c.l.b16 %v1786
    %v1851 = vunpack.c.l.b16 %v1787
    %v1852 = vunpack.c.l.b16 %v1788
    %v1853 = vunpack.c.l.b16 %v1789
    %v1854 = vunpack.c.l.b16 %v1790
    %v1855 = vunpack.c.l.b16 %v1791
    %v1856 = vunpack.c.l.b16 %v1792
    %v1857 = vunpack.c.l.b16 %v1793
    %v1858 = vunpack.c.l.b16 %v1794
    %v1859 = vunpack.c.l.b16 %v1795
    %v1860 = vunpack.c.l.b16 %v1796
    %v1861 = vunpack.c.l.b16 %v1797
    %v1862 = vunpack.c.l.b16 %v1798
    %v1863 = vunpack.c.l.b16 %v1799
    %v1864 = vunpack.c.l.b16 %v1800
    %v1865 = vpack.c.b16 %v1834, %v1833
    %v1866 = vpack.c.b16 %v1836, %v1835
    %v1867 = vpack.c.b16 %v1838, %v1837
    %v1868 = vpack.c.b16 %v1840, %v1839
    %v1869 = vpack.c.b16 %v1842, %v1841
    %v1870 = vpack.c.b16 %v1844, %v1843
    %v1871 = vpack.c.b16 %v1846, %v1845
    %v1872 = vpack.c.b16 %v1848, %v1847
    %v1873 = vpack.c.b16 %v1850, %v1849
    %v1874 = vpack.c.b16 %v1852, %v1851
    %v1875 = vpack.c.b16 %v1854, %v1853
    %v1876 = vpack.c.b16 %v1856, %v1855
    %v1877 = vpack.c.b16 %v1858, %v1857
    %v1878 = vpack.c.b16 %v1860, %v1859
    %v1879 = vpack.c.b16 %v1862, %v1861
    %v1880 = vpack.c.b16 %v1864, %v1863
    %1897 = vmatprep.subr.bf16.mxu0 0
    %1898 = vmatpush1.bf16.msra.mxu0 %v1872
    %1899 = vmatprep.subr.bf16.mxu0 0
    %1900 = vmatpush1.bf16.msra.mxu0 %v1871
    %1901 = vmatprep.subr.bf16.mxu0 0
    %1902 = vmatpush1.bf16.msra.mxu0 %v1870
    %1903 = vmatprep.subr.bf16.mxu0 0
    %1904 = vmatpush1.bf16.msra.mxu0 %v1869
    %1905 = vmatprep.subr.bf16.mxu0 0
    %1906 = vmatpush1.bf16.msra.mxu0 %v1868
    %1907 = vmatprep.subr.bf16.mxu0 0
    %1908 = vmatpush1.bf16.msra.mxu0 %v1867
    %1909 = vmatprep.subr.bf16.mxu0 0
    %1910 = vmatpush1.bf16.msra.mxu0 %v1866
    %1911 = vmatprep.subr.bf16.mxu0 0
    %1912 = vmatpush1.bf16.msra.mxu0 %v1865
    %1913 = vmatprep.subr.bf16.mxu0 0
    %1914 = vmatpush2.bf16.msra.mxu0 %v1880
    %1915 = vmatprep.subr.bf16.mxu0 0
    %1916 = vmatpush2.bf16.msra.mxu0 %v1879
    %1917 = vmatprep.subr.bf16.mxu0 0
    %1918 = vmatpush2.bf16.msra.mxu0 %v1878
    %1919 = vmatprep.subr.bf16.mxu0 0
    %1920 = vmatpush2.bf16.msra.mxu0 %v1877
    %1921 = vmatprep.subr.bf16.mxu0 0
    %1922 = vmatpush2.bf16.msra.mxu0 %v1876
    %1923 = vmatprep.subr.bf16.mxu0 0
    %1924 = vmatpush2.bf16.msra.mxu0 %v1875
    %1925 = vmatprep.subr.bf16.mxu0 0
    %1926 = vmatpush2.bf16.msra.mxu0 %v1874
    %1927 = vmatprep.subr.bf16.mxu0 0
    %1928 = vmatpush2.bf16.msra.mxu0 %v1873
    %1929 = vmatprep.mubr.bf16.mxu0 %v1768
    %1930 = vmatmul.mubr.bf16.gmra.mxu0 %v1767
    %v1931 = vpop.f32.mrf.mxu0
    %v1932 = vadd.f32 %v185, %v1931
    %v1933 = vpop.f32.mrf.mxu0
    %v1934 = vpop.f32.mrf.mxu0
    %v1935 = vadd.f32 %v185, %v1934
    %v1936 = vpop.f32.mrf.mxu0
    %1937 = vdwg.mxu0
    %v1938 = vmax.f32 %v1932, 0.0
    %v1939 = vmax.f32 %v1935, 0.0
    %v1940 = vpack.c.bf16 %v1939, %v1938
    %v1941 = vld [vmem:[#allocation17] sm:$0xf]
    %v1942 = vld [vmem:[#allocation17 + $0x4] sm:$0xf]
    %v1943 = vld [vmem:[#allocation17 + $0x8] sm:$0xf]
    %v1944 = vld [vmem:[#allocation17 + $0xc] sm:$0xf]
    %v1945 = vld [vmem:[#allocation17 + $0x10] sm:$0xf]
    %v1946 = vld [vmem:[#allocation17 + $0x14] sm:$0xf]
    %v1947 = vld [vmem:[#allocation17 + $0x18] sm:$0xf]
    %v1948 = vld [vmem:[#allocation17 + $0x1c] sm:$0xf]
    %v1949 = vld [vmem:[#allocation17 + $0x20] sm:$0xf]
    %v1950 = vld [vmem:[#allocation17 + $0x24] sm:$0xf]
    %v1951 = vld [vmem:[#allocation17 + $0x28] sm:$0xf]
    %v1952 = vld [vmem:[#allocation17 + $0x2c] sm:$0xf]
    %v1953 = vld [vmem:[#allocation17 + $0x30] sm:$0xf]
    %v1954 = vld [vmem:[#allocation17 + $0x34] sm:$0xf]
    %v1955 = vld [vmem:[#allocation17 + $0x38] sm:$0xf]
    %v1956 = vld [vmem:[#allocation17 + $0x3c] sm:$0xf]
    %v1973 = vunpack.c.l.b16 %v1941
    %v1974 = vunpack.c.l.b16 %v1942
    %v1975 = vunpack.c.l.b16 %v1943
    %v1976 = vunpack.c.l.b16 %v1944
    %v1977 = vunpack.c.l.b16 %v1945
    %v1978 = vunpack.c.l.b16 %v1946
    %v1979 = vunpack.c.l.b16 %v1947
    %v1980 = vunpack.c.l.b16 %v1948
    %v1981 = vunpack.c.l.b16 %v1949
    %v1982 = vunpack.c.l.b16 %v1950
    %v1983 = vunpack.c.l.b16 %v1951
    %v1984 = vunpack.c.l.b16 %v1952
    %v1985 = vunpack.c.l.b16 %v1953
    %v1986 = vunpack.c.l.b16 %v1954
    %v1987 = vunpack.c.l.b16 %v1955
    %v1988 = vunpack.c.l.b16 %v1956
    %v1989 = vpack.c.b16 %v1974, %v1973
    %v1990 = vpack.c.b16 %v1976, %v1975
    %v1991 = vpack.c.b16 %v1978, %v1977
    %v1992 = vpack.c.b16 %v1980, %v1979
    %v1993 = vpack.c.b16 %v1982, %v1981
    %v1994 = vpack.c.b16 %v1984, %v1983
    %v1995 = vpack.c.b16 %v1986, %v1985
    %v1996 = vpack.c.b16 %v1988, %v1987
    %2005 = vmatprep.subr.bf16.mxu0 0
    %2006 = vmatpush1.bf16.msra.mxu0 %v1996
    %2007 = vmatprep.subr.bf16.mxu0 0
    %2008 = vmatpush1.bf16.msra.mxu0 %v1995
    %2009 = vmatprep.subr.bf16.mxu0 0
    %2010 = vmatpush1.bf16.msra.mxu0 %v1994
    %2011 = vmatprep.subr.bf16.mxu0 0
    %2012 = vmatpush1.bf16.msra.mxu0 %v1993
    %2013 = vmatprep.subr.bf16.mxu0 0
    %2014 = vmatpush1.bf16.msra.mxu0 %v1992
    %2015 = vmatprep.subr.bf16.mxu0 0
    %2016 = vmatpush1.bf16.msra.mxu0 %v1991
    %2017 = vmatprep.subr.bf16.mxu0 0
    %2018 = vmatpush1.bf16.msra.mxu0 %v1990
    %2019 = vmatprep.subr.bf16.mxu0 0
    %2020 = vmatpush1.bf16.msra.mxu0 %v1989
    %2021 = vmatprep.subr.bf16.mxu0 0
    %2022 = vmatpush2.bf16.msra.mxu0 0
    %2023 = vmatprep.subr.bf16.mxu0 0
    %2024 = vmatpush2.bf16.msra.mxu0 0
    %2025 = vmatprep.subr.bf16.mxu0 0
    %2026 = vmatpush2.bf16.msra.mxu0 0
    %2027 = vmatprep.subr.bf16.mxu0 0
    %2028 = vmatpush2.bf16.msra.mxu0 0
    %2029 = vmatprep.subr.bf16.mxu0 0
    %2030 = vmatpush2.bf16.msra.mxu0 0
    %2031 = vmatprep.subr.bf16.mxu0 0
    %2032 = vmatpush2.bf16.msra.mxu0 0
    %2033 = vmatprep.subr.bf16.mxu0 0
    %2034 = vmatpush2.bf16.msra.mxu0 0
    %2035 = vmatprep.subr.bf16.mxu0 0
    %2036 = vmatpush2.bf16.msra.mxu0 0
    %2037 = vmatprep.mubr.bf16.mxu0 0
    %2038 = vmatmul.mubr.bf16.gmra.mxu0 %v1940
    %v2039 = vpop.f32.mrf.mxu0
    %v2040 = vadd.f32 %v186, %v2039
    %v2041 = vpop.f32.mrf.mxu0
    %v2042 = vpop.f32.mrf.mxu0
    %v2043 = vadd.f32 %v186, %v2042
    %v2044 = vpop.f32.mrf.mxu0
    %2045 = vdwg.mxu0
    %2046 = vst [vmem:[#allocation19] sm:$0xff] %v2040
    %2047 = vst [vmem:[#allocation19 + $0x8] sm:$0xff] %v2043
    // Predicated region
    $region86: #{tpu_custom_call.1} parent=1 // pred_check
      _
    $region87: #{tpu_custom_call.1} parent=1 // pred_check_branch
      %2049 = sbr.rel (0) target = $region89
    $region88: #{tpu_custom_call.1} parent=1 // pred_region
      %s2051 = ssub.s32 256, 256
      %2052 = vsyncadd [#allocation4], %s2051
      %s2053 = sshll.u32 [#allocation19], 4
      %s2054 = int_to_ptr.vmem [resolvable:$true] %s2053
      %2059 = dma.vmem_to_hbm [thread:$0]  %s2054, 256, %s11, [#allocation4], 128, 128, 8
    $region89: #{tpu_custom_call.1} parent=1 // pred_fallthru
      _
    // Predicated region
    $region90: #{tpu_custom_call.1} parent=1 // pred_check
      _
    $region91: #{tpu_custom_call.1} parent=1 // pred_check_branch
      %2061 = sbr.rel (0) target = $region93
    $region92: #{tpu_custom_call.1} parent=1 // pred_region
      %2062 = dma.done [#allocation4], 256
    $region93: #{tpu_custom_call.1} parent=1 // pred_fallthru
      _
    %2063 = vsyncpa [#allocation3], 1
    %2064 = vsyncpa [#allocation6], 1
    %2065 = vsyncpa [#allocation9], 1
    %2066 = vsyncpa [#allocation12], 1
    %2067 = vsyncpa [#allocation15], 1
    %2068 = vsyncpa [#allocation18], 1
    %2069 = vsyncpa [#allocation4], 1

</llo_original>
